<compile_context>
chip_gen: v7x
topology: tpu7x:2x2x1
jax: 0.10.0
libtpu: 0.0.40
codegen_flags: <defaults>
</compile_context>

<pallas_src>
import math
import functools

import jax
import jax.numpy as jnp
from jax.experimental import pallas as pl
from jax.experimental.pallas import tpu as pltpu

WIN = 9  # 2-D case: win = [9, 9]
WIN_SIZE = float(WIN * WIN)


def _round_up(x: int, m: int) -> int:
    return ((x + m - 1) // m) * m


def _ncc_kernel(i_ref, j_ref, aw_ref, aht_ref, out_ref):
    bt, hp, wp = i_ref.shape

    I = i_ref[...].reshape(bt * hp, wp).astype(jnp.float32)  # (Bt*Hp, Wp)
    J = j_ref[...].reshape(bt * hp, wp).astype(jnp.float32)

    # Stack the five quantities along rows -> one big RHS-pass matmul (M = 5*Bt*Hp).
    S = jnp.concatenate([I, J, I * I, J * J, I * J], axis=0)          # (5*Bt*Hp, Wp)
    T = jnp.dot(S, aw_ref[...], preferred_element_type=jnp.float32)  # (5*Bt*Hp, Wp)

    # Left pass via the transpose trick: AH @ Y == (Y^T @ AH^T)^T.
    # Per-plane 2-D transposes (XLU) then one big matmul with M = 5*Bt*Wp.
    n_planes = 5 * bt
    planes_t = [T[p * hp:(p + 1) * hp, :].T for p in range(n_planes)]  # each (Wp, Hp)
    U = jnp.concatenate(planes_t, axis=0)                              # (5*Bt*Wp, Hp)
    V = jnp.dot(U, aht_ref[...], preferred_element_type=jnp.float32)   # (5*Bt*Wp, Hp)

    # V holds boxsum(X)^T per plane; everything below is elementwise, orientation-free.
    g = bt * wp
    I_sum = V[0 * g:1 * g, :]
    J_sum = V[1 * g:2 * g, :]
    I2_sum = V[2 * g:3 * g, :]
    J2_sum = V[3 * g:4 * g, :]
    IJ_sum = V[4 * g:5 * g, :]

    inv_ws = 1.0 / WIN_SIZE
    u_I = I_sum * inv_ws
    u_J = J_sum * inv_ws

    cross = IJ_sum - u_J * I_sum - u_I * J_sum + u_I * u_J * WIN_SIZE
    I_var = I2_sum - 2.0 * u_I * I_sum + u_I * u_I * WIN_SIZE
    J_var = J2_sum - 2.0 * u_J * J_sum + u_J * u_J * WIN_SIZE

    # divide -> EUP reciprocal * multiply (exact mode to stay within test tolerance)
    cc = cross * cross * pl.reciprocal(I_var * J_var + 1e-5, approx=False)

    # Lane-shaped partial sum for this batch block; full reduction happens in the wrapper.
    out_ref[...] = jnp.sum(cc, axis=0).reshape(1, 1, hp)


@functools.partial(jax.jit)
def ncc_vxm_loss(y_true: jnp.ndarray, y_pred: jnp.ndarray) -> jnp.ndarray:
    """Pallas implementation of NCC_vxm.forward for 2-D inputs (N, 1, H, W)."""
    assert y_true.ndim == 4, "expected NCHW"
    B, C, H, W = y_true.shape
    assert C == 1, "box filter has a single input channel"

    Ii = y_true.reshape(B, H, W).astype(jnp.float32)
    Ji = y_pred.reshape(B, H, W).astype(jnp.float32)

    half = math.floor(WIN / 2)

    # Pad H to sublane multiple (8) and W to lane multiple (128).
    Hp = _round_up(H, 8)
    Wp = _round_up(W, 128)

    # Band matrices for the zero-padded 'same' box filter, with the padded output
    # rows/cols masked to zero so cc == 0 on every padded position.
    hidx = jnp.arange(Hp)
    AH = ((jnp.abs(hidx[:, None] - hidx[None, :]) <= half)
          & (hidx[:, None] < H)).astype(jnp.float32)          # rows >= H zeroed
    AHT = AH.T                                                # pass AH^T to the kernel
    widx = jnp.arange(Wp)
    AW = ((jnp.abs(widx[:, None] - widx[None, :]) <= half)
          & (widx[None, :] < W)).astype(jnp.float32)          # cols >= W zeroed

    # Batch planes per grid step: aim for Bt*Hp >= 256 to fill the MXU M dimension,
    # capped to keep the in-kernel unroll and VMEM footprint bounded.
    Bt = max(1, min(B, -(-256 // Hp), 8))
    Bp = _round_up(B, Bt)
    nb = Bp // Bt

    # Zero-padded planes / batches contribute exactly 0 to the cc sum.
    Ii = jnp.pad(Ii, ((0, Bp - B), (0, Hp - H), (0, Wp - W)))
    Ji = jnp.pad(Ji, ((0, Bp - B), (0, Hp - H), (0, Wp - W)))

    partials = pl.pallas_call(
        _ncc_kernel,
        out_shape=jax.ShapeDtypeStruct((nb, 1, Hp), jnp.float32),
        grid_spec=pltpu.PrefetchScalarGridSpec(
            num_scalar_prefetch=0,
            grid=(nb,),
            in_specs=[
                pl.BlockSpec((Bt, Hp, Wp), lambda b: (b, 0, 0)),
                pl.BlockSpec((Bt, Hp, Wp), lambda b: (b, 0, 0)),
                pl.BlockSpec((Wp, Wp), lambda b: (0, 0)),
                pl.BlockSpec((Hp, Hp), lambda b: (0, 0)),
            ],
            out_specs=pl.BlockSpec((1, 1, Hp), lambda b: (b, 0, 0)),
        ),
        compiler_params=pltpu.CompilerParams(
            dimension_semantics=("parallel",),          # batch blocks are independent
            vmem_limit_bytes=64 * 1024 * 1024,          # explicit VMEM budget
        ),
    )(Ii, Ji, AW, AHT)

    n_elems = B * C * H * W
    return -(jnp.sum(partials) / n_elems)


def _ncc_reference(y_true, y_pred):
    """Pure-JAX reference (zero-padded 9x9 box sums) mirroring the PyTorch module."""
    B, C, H, W = y_true.shape
    Ii = y_true.reshape(B, H, W).astype(jnp.float32)
    Ji = y_pred.reshape(B, H, W).astype(jnp.float32)
    half = WIN // 2
    hidx = jnp.arange(H)
    AH = (jnp.abs(hidx[:, None] - hidx[None, :]) <= half).astype(jnp.float32)
    widx = jnp.arange(W)
    AW = (jnp.abs(widx[:, None] - widx[None, :]) <= half).astype(jnp.float32)

    def boxsum(x):
        return jnp.einsum("hk,bkw,wl->bhl", AH, x, AW)

    I_sum, J_sum = boxsum(Ii), boxsum(Ji)
    I2_sum, J2_sum, IJ_sum = boxsum(Ii * Ii), boxsum(Ji * Ji), boxsum(Ii * Ji)
    ws = WIN_SIZE
    u_I, u_J = I_sum / ws, J_sum / ws
    cross = IJ_sum - u_J * I_sum - u_I * J_sum + u_I * u_J * ws
    I_var = I2_sum - 2 * u_I * I_sum + u_I * u_I * ws
    J_var = J2_sum - 2 * u_J * J_sum + u_J * u_J * ws
    cc = cross * cross / (I_var * J_var + 1e-5)
    return -jnp.mean(cc)


if __name__ == "__main__":
    key = jax.random.PRNGKey(0)
    k1, k2 = jax.random.split(key)
    B, C, H, W = 2, 1, 16, 16  # NCHW, C must be 1 for the 1-channel box filter
    y_true = jax.random.normal(k1, (B, C, H, W), dtype=jnp.float32)
    y_pred = jax.random.normal(k2, (B, C, H, W), dtype=jnp.float32)

    loss = ncc_vxm_loss(y_true, y_pred)
    jax.block_until_ready(loss)

    ref = _ncc_reference(y_true, y_pred)
    assert jnp.allclose(loss, ref, rtol=1e-4, atol=1e-5), (loss, ref)

    print("KERNEL_OK")
</pallas_src>

<mosaic_0001>
module attributes {stable_mosaic.version = 11 : i64} {
  func.func @_ncc_kernel(%arg0: i32, %arg1: memref<2x16x128xf32, #tpu.memory_space<vmem>>, %arg2: memref<2x16x128xf32, #tpu.memory_space<vmem>>, %arg3: memref<128x128xf32, #tpu.memory_space<vmem>>, %arg4: memref<16x16xf32, #tpu.memory_space<vmem>>, %arg5: memref<1x1x16xf32, #tpu.memory_space<vmem>>) attributes {dimension_semantics = [#tpu.dimension_semantics<parallel>], iteration_bounds = array<i64: 1>, scalar_prefetch = 0 : i64, scratch_operands = 0 : i64, tpu.core_type = #tpu.core_type<tc>, window_params = [{transform_indices = @transform_0, window_bounds = array<i64: 2, 16, 128>}, {transform_indices = @transform_1, window_bounds = array<i64: 2, 16, 128>}, {pipeline_mode = #tpu.pipeline_mode<synchronous>, transform_indices = @transform_2, window_bounds = array<i64: 128, 128>}, {pipeline_mode = #tpu.pipeline_mode<synchronous>, transform_indices = @transform_3, window_bounds = array<i64: 16, 16>}, {transform_indices = @transform_4, window_bounds = array<i64: 1, 1, 16>}]} {
    %c0 = arith.constant 0 : index
    %c0_0 = arith.constant 0 : index
    %c0_1 = arith.constant 0 : index
    %0 = vector.load %arg1[%c0, %c0_0, %c0_1] : memref<2x16x128xf32, #tpu.memory_space<vmem>>, vector<2x16x128xf32>
    %1 = vector.shape_cast %0 : vector<2x16x128xf32> to vector<32x128xf32>
    %c0_2 = arith.constant 0 : index
    %c0_3 = arith.constant 0 : index
    %c0_4 = arith.constant 0 : index
    %2 = vector.load %arg2[%c0_2, %c0_3, %c0_4] : memref<2x16x128xf32, #tpu.memory_space<vmem>>, vector<2x16x128xf32>
    %3 = vector.shape_cast %2 : vector<2x16x128xf32> to vector<32x128xf32>
    %4 = arith.mulf %1, %1 : vector<32x128xf32>
    %5 = arith.mulf %3, %3 : vector<32x128xf32>
    %6 = arith.mulf %1, %3 : vector<32x128xf32>
    %7 = tpu.concatenate %1, %3, %4, %5, %6 in 0 : vector<32x128xf32>, vector<32x128xf32>, vector<32x128xf32>, vector<32x128xf32>, vector<32x128xf32> -> vector<160x128xf32>
    %c0_5 = arith.constant 0 : index
    %c0_6 = arith.constant 0 : index
    %8 = vector.load %arg3[%c0_5, %c0_6] : memref<128x128xf32, #tpu.memory_space<vmem>>, vector<128x128xf32>
    %cst = arith.constant dense<0.000000e+00> : vector<160x128xf32>
    %9 = tpu.matmul %7, %8, %cst {dimension_numbers = #tpu.dot_dimension_numbers<[1], [0], [0], [1], [0, 0, 1, 1], [], []>} : vector<160x128xf32>, vector<128x128xf32>, vector<160x128xf32> -> vector<160x128xf32>
    %10 = vector.extract_strided_slice %9 {offsets = [0, 0], sizes = [16, 128], strides = [1, 1]} : vector<160x128xf32> to vector<16x128xf32>
    %11 = tpu.transpose %10, [1, 0] : vector<16x128xf32> -> vector<128x16xf32>
    %12 = vector.extract_strided_slice %9 {offsets = [16, 0], sizes = [16, 128], strides = [1, 1]} : vector<160x128xf32> to vector<16x128xf32>
    %13 = tpu.transpose %12, [1, 0] : vector<16x128xf32> -> vector<128x16xf32>
    %14 = vector.extract_strided_slice %9 {offsets = [32, 0], sizes = [16, 128], strides = [1, 1]} : vector<160x128xf32> to vector<16x128xf32>
    %15 = tpu.transpose %14, [1, 0] : vector<16x128xf32> -> vector<128x16xf32>
    %16 = vector.extract_strided_slice %9 {offsets = [48, 0], sizes = [16, 128], strides = [1, 1]} : vector<160x128xf32> to vector<16x128xf32>
    %17 = tpu.transpose %16, [1, 0] : vector<16x128xf32> -> vector<128x16xf32>
    %18 = vector.extract_strided_slice %9 {offsets = [64, 0], sizes = [16, 128], strides = [1, 1]} : vector<160x128xf32> to vector<16x128xf32>
    %19 = tpu.transpose %18, [1, 0] : vector<16x128xf32> -> vector<128x16xf32>
    %20 = vector.extract_strided_slice %9 {offsets = [80, 0], sizes = [16, 128], strides = [1, 1]} : vector<160x128xf32> to vector<16x128xf32>
    %21 = tpu.transpose %20, [1, 0] : vector<16x128xf32> -> vector<128x16xf32>
    %22 = vector.extract_strided_slice %9 {offsets = [96, 0], sizes = [16, 128], strides = [1, 1]} : vector<160x128xf32> to vector<16x128xf32>
    %23 = tpu.transpose %22, [1, 0] : vector<16x128xf32> -> vector<128x16xf32>
    %24 = vector.extract_strided_slice %9 {offsets = [112, 0], sizes = [16, 128], strides = [1, 1]} : vector<160x128xf32> to vector<16x128xf32>
    %25 = tpu.transpose %24, [1, 0] : vector<16x128xf32> -> vector<128x16xf32>
    %26 = vector.extract_strided_slice %9 {offsets = [128, 0], sizes = [16, 128], strides = [1, 1]} : vector<160x128xf32> to vector<16x128xf32>
    %27 = tpu.transpose %26, [1, 0] : vector<16x128xf32> -> vector<128x16xf32>
    %28 = vector.extract_strided_slice %9 {offsets = [144, 0], sizes = [16, 128], strides = [1, 1]} : vector<160x128xf32> to vector<16x128xf32>
    %29 = tpu.transpose %28, [1, 0] : vector<16x128xf32> -> vector<128x16xf32>
    %30 = tpu.concatenate %11, %13, %15, %17, %19, %21, %23, %25, %27, %29 in 0 : vector<128x16xf32>, vector<128x16xf32>, vector<128x16xf32>, vector<128x16xf32>, vector<128x16xf32>, vector<128x16xf32>, vector<128x16xf32>, vector<128x16xf32>, vector<128x16xf32>, vector<128x16xf32> -> vector<1280x16xf32>
    %c0_7 = arith.constant 0 : index
    %c0_8 = arith.constant 0 : index
    %31 = vector.load %arg4[%c0_7, %c0_8] : memref<16x16xf32, #tpu.memory_space<vmem>>, vector<16x16xf32>
    %cst_9 = arith.constant dense<0.000000e+00> : vector<1280x16xf32>
    %32 = tpu.matmul %30, %31, %cst_9 {dimension_numbers = #tpu.dot_dimension_numbers<[1], [0], [0], [1], [0, 0, 1, 1], [], []>} : vector<1280x16xf32>, vector<16x16xf32>, vector<1280x16xf32> -> vector<1280x16xf32>
    %33 = vector.extract_strided_slice %32 {offsets = [0, 0], sizes = [256, 16], strides = [1, 1]} : vector<1280x16xf32> to vector<256x16xf32>
    %34 = vector.extract_strided_slice %32 {offsets = [256, 0], sizes = [256, 16], strides = [1, 1]} : vector<1280x16xf32> to vector<256x16xf32>
    %35 = vector.extract_strided_slice %32 {offsets = [512, 0], sizes = [256, 16], strides = [1, 1]} : vector<1280x16xf32> to vector<256x16xf32>
    %36 = vector.extract_strided_slice %32 {offsets = [768, 0], sizes = [256, 16], strides = [1, 1]} : vector<1280x16xf32> to vector<256x16xf32>
    %37 = vector.extract_strided_slice %32 {offsets = [1024, 0], sizes = [256, 16], strides = [1, 1]} : vector<1280x16xf32> to vector<256x16xf32>
    %cst_10 = arith.constant 0.0123456791 : f32
    %38 = vector.broadcast %cst_10 : f32 to vector<256x16xf32>
    %39 = arith.mulf %33, %38 : vector<256x16xf32>
    %cst_11 = arith.constant 0.0123456791 : f32
    %40 = vector.broadcast %cst_11 : f32 to vector<256x16xf32>
    %41 = arith.mulf %34, %40 : vector<256x16xf32>
    %42 = arith.mulf %41, %33 : vector<256x16xf32>
    %43 = arith.subf %37, %42 : vector<256x16xf32>
    %44 = arith.mulf %39, %34 : vector<256x16xf32>
    %45 = arith.subf %43, %44 : vector<256x16xf32>
    %46 = arith.mulf %39, %41 : vector<256x16xf32>
    %cst_12 = arith.constant 8.100000e+01 : f32
    %47 = vector.broadcast %cst_12 : f32 to vector<256x16xf32>
    %48 = arith.mulf %46, %47 : vector<256x16xf32>
    %49 = arith.addf %45, %48 : vector<256x16xf32>
    %cst_13 = arith.constant 2.000000e+00 : f32
    %50 = vector.broadcast %cst_13 : f32 to vector<256x16xf32>
    %51 = arith.mulf %50, %39 : vector<256x16xf32>
    %52 = arith.mulf %51, %33 : vector<256x16xf32>
    %53 = arith.subf %35, %52 : vector<256x16xf32>
    %54 = arith.mulf %39, %39 : vector<256x16xf32>
    %cst_14 = arith.constant 8.100000e+01 : f32
    %55 = vector.broadcast %cst_14 : f32 to vector<256x16xf32>
    %56 = arith.mulf %54, %55 : vector<256x16xf32>
    %57 = arith.addf %53, %56 : vector<256x16xf32>
    %cst_15 = arith.constant 2.000000e+00 : f32
    %58 = vector.broadcast %cst_15 : f32 to vector<256x16xf32>
    %59 = arith.mulf %58, %41 : vector<256x16xf32>
    %60 = arith.mulf %59, %34 : vector<256x16xf32>
    %61 = arith.subf %36, %60 : vector<256x16xf32>
    %62 = arith.mulf %41, %41 : vector<256x16xf32>
    %cst_16 = arith.constant 8.100000e+01 : f32
    %63 = vector.broadcast %cst_16 : f32 to vector<256x16xf32>
    %64 = arith.mulf %62, %63 : vector<256x16xf32>
    %65 = arith.addf %61, %64 : vector<256x16xf32>
    %66 = arith.mulf %49, %49 : vector<256x16xf32>
    %67 = arith.mulf %57, %65 : vector<256x16xf32>
    %cst_17 = arith.constant 9.99999974E-6 : f32
    %68 = vector.broadcast %cst_17 : f32 to vector<256x16xf32>
    %69 = arith.addf %67, %68 : vector<256x16xf32>
    %70 = tpu.reciprocal %69 : vector<256x16xf32> -> vector<256x16xf32>
    %71 = arith.mulf %66, %70 : vector<256x16xf32>
    %cst_18 = arith.constant dense<0.000000e+00> : vector<16xf32>
    %72 = vector.multi_reduction <add>, %71, %cst_18 [0] : vector<256x16xf32> to vector<16xf32>
    %73 = vector.shape_cast %72 : vector<16xf32> to vector<1x1x16xf32>
    %c0_19 = arith.constant 0 : index
    %c0_20 = arith.constant 0 : index
    %c0_21 = arith.constant 0 : index
    %74 = vector.load %arg5[%c0_19, %c0_20, %c0_21] : memref<1x1x16xf32, #tpu.memory_space<vmem>>, vector<1x1x16xf32>
    tpu.vector_store %arg5[%c0_19, %c0_20, %c0_21], %73 {strides = array<i32>} : memref<1x1x16xf32, #tpu.memory_space<vmem>>, vector<1x1x16xf32>,
    return
  }
  func.func @transform_0(%arg0: i32) -> (i32, i32, i32) {
    %c0_i32 = arith.constant 0 : i32
    %c0_i32_0 = arith.constant 0 : i32
    %c0_i32_1 = arith.constant 0 : i32
    return %arg0, %c0_i32, %c0_i32_0 : i32, i32, i32
  }
  func.func @transform_1(%arg0: i32) -> (i32, i32, i32) {
    %c0_i32 = arith.constant 0 : i32
    %c0_i32_0 = arith.constant 0 : i32
    %c0_i32_1 = arith.constant 0 : i32
    return %arg0, %c0_i32, %c0_i32_0 : i32, i32, i32
  }
  func.func @transform_2(%arg0: i32) -> (i32, i32) {
    %c0_i32 = arith.constant 0 : i32
    %c0_i32_0 = arith.constant 0 : i32
    %c0_i32_1 = arith.constant 0 : i32
    return %c0_i32, %c0_i32_0 : i32, i32
  }
  func.func @transform_3(%arg0: i32) -> (i32, i32) {
    %c0_i32 = arith.constant 0 : i32
    %c0_i32_0 = arith.constant 0 : i32
    %c0_i32_1 = arith.constant 0 : i32
    return %c0_i32, %c0_i32_0 : i32, i32
  }
  func.func @transform_4(%arg0: i32) -> (i32, i32, i32) {
    %c0_i32 = arith.constant 0 : i32
    %c0_i32_0 = arith.constant 0 : i32
    %c0_i32_1 = arith.constant 0 : i32
    return %arg0, %c0_i32, %c0_i32_0 : i32, i32, i32
  }
}

</mosaic_0001>

<llo_original>
// kernel: ncc_vxm_loss.1
$region0: #{ncc_vxm_loss.1}
  #allocation0 [shape = 'u32[]', space=smem, size = 0x4, offset = 0x4, fixed_abs, tag = 'smem constant byte address 0x4 - core index']
  #allocation1 [shape = 'u32[144,128]{1,0:T(1,128)}', space=vmem, size = 0x12000, scoped, tag = 'internal scratch']
  %s0 = inlined_call_operand.hbm [shape: f32[2,16,128], index: 0, kind: input, shape index: {}]
  %s1 = inlined_call_operand.hbm [shape: f32[2,16,128], index: 1, kind: input, shape index: {}]
  %s2 = inlined_call_operand.hbm [shape: f32[128,128], index: 2, kind: input, shape index: {}]
  %s3 = inlined_call_operand.hbm [shape: f32[16,16], index: 3, kind: input, shape index: {}]
  %s4 = inlined_call_operand.hbm [shape: f32[1,1,16], index: 4, kind: output, shape index: {}]
  %s5 = sld [smem:[#allocation0]]
  $region42: #{ncc_vxm_loss.1} parent=0
    _
  %s7 = ssub.s32 1, %s5
  %s8 = scalar_select 0, %s7, %s5
  $region1: #{ncc_vxm_loss.1} parent=0
    #allocation2 [shape = 'u8[16384]{0}', space=vmem, size = 0x4000, scoped, tag = 'input window, operand 0, single buffered']
    #allocation3 [shape = 's32[1]{0}', space=sflag, size = 0x4, scoped, tag = 'scoped memory for ncc_vxm_loss.1']
    #allocation4 [shape = 's32[1]{0}', space=sflag, size = 0x4, scoped, tag = 'scoped memory for ncc_vxm_loss.1']
    #allocation5 [shape = 'u8[16384]{0}', space=vmem, size = 0x4000, scoped, tag = 'input window, operand 1, single buffered']
    #allocation6 [shape = 's32[1]{0}', space=sflag, size = 0x4, scoped, tag = 'scoped memory for ncc_vxm_loss.1']
    #allocation7 [shape = 'u8[65536]{0}', space=vmem, size = 0x10000, scoped, tag = 'input window, operand 2, single buffered']
    #allocation8 [shape = 'u8[8192]{0}', space=vmem, size = 0x2000, scoped, tag = 'input window, operand 3, single buffered']
    #allocation9 [shape = 's32[1]{0}', space=sflag, size = 0x4, scoped, tag = 'scoped memory for ncc_vxm_loss.1']
    #allocation10 [shape = 'u8[512]{0}', space=vmem, size = 0x400, scoped, tag = 'output window, operand 0, single buffered']
    %9 = vsyncpa [#allocation3], 0
    %10 = vsyncpa [#allocation6], 0
    %11 = vsyncpa [#allocation9], 0
    %12 = vsyncpa [#allocation4], 0
    // Predicated region
    $region2: #{ncc_vxm_loss.1} parent=1 // pred_check
      _
    $region3: #{ncc_vxm_loss.1} parent=1 // pred_check_branch
      %14 = sbr.rel (0) target = $region5
    $region4: #{ncc_vxm_loss.1} parent=1 // pred_region
      %s16 = ssub.s32 512, 512
      %17 = vsyncadd [#allocation3], %s16
      %s18 = sshll.u32 [#allocation2], 4
      %s19 = int_to_ptr.vmem [resolvable:$true] %s18
      %24 = dma.hbm_to_vmem [thread:$0]  %s0, 512, %s19, [#allocation3], 128, 128, 8
    $region5: #{ncc_vxm_loss.1} parent=1 // pred_fallthru
      _
    // Predicated region
    $region6: #{ncc_vxm_loss.1} parent=1 // pred_check
      _
    $region7: #{ncc_vxm_loss.1} parent=1 // pred_check_branch
      %26 = sbr.rel (0) target = $region9
    $region8: #{ncc_vxm_loss.1} parent=1 // pred_region
      %s28 = ssub.s32 512, 512
      %29 = vsyncadd [#allocation6], %s28
      %s30 = sshll.u32 [#allocation5], 4
      %s31 = int_to_ptr.vmem [resolvable:$true] %s30
      %36 = dma.hbm_to_vmem [thread:$0]  %s1, 512, %s31, [#allocation6], 128, 128, 8
    $region9: #{ncc_vxm_loss.1} parent=1 // pred_fallthru
      _
    // Predicated region
    $region10: #{ncc_vxm_loss.1} parent=1 // pred_check
      _
    $region11: #{ncc_vxm_loss.1} parent=1 // pred_check_branch
      %38 = sbr.rel (0) target = $region13
    $region12: #{ncc_vxm_loss.1} parent=1 // pred_region
      %s40 = ssub.s32 2048, 2048
      %41 = vsyncadd [#allocation6], %s40
      %s42 = sshll.u32 [#allocation7], 4
      %s43 = int_to_ptr.vmem [resolvable:$true] %s42
      %48 = dma.hbm_to_vmem [thread:$0]  %s2, 2048, %s43, [#allocation6], 128, 128, 8
    $region13: #{ncc_vxm_loss.1} parent=1 // pred_fallthru
      _
    // Predicated region
    $region14: #{ncc_vxm_loss.1} parent=1 // pred_check
      _
    $region15: #{ncc_vxm_loss.1} parent=1 // pred_check_branch
      %50 = sbr.rel (0) target = $region17
    $region16: #{ncc_vxm_loss.1} parent=1 // pred_region
      %s52 = ssub.s32 256, 256
      %53 = vsyncadd [#allocation9], %s52
      %s54 = sshll.u32 [#allocation8], 4
      %s55 = int_to_ptr.vmem [resolvable:$true] %s54
      %60 = dma.hbm_to_vmem [thread:$0]  %s3, 256, %s55, [#allocation9], 128, 128, 8
    $region17: #{ncc_vxm_loss.1} parent=1 // pred_fallthru
      _
    // Predicated region
    $region18: #{ncc_vxm_loss.1} parent=1 // pred_check
      _
    $region19: #{ncc_vxm_loss.1} parent=1 // pred_check_branch
      %62 = sbr.rel (0) target = $region21
    $region20: #{ncc_vxm_loss.1} parent=1 // pred_region
      %63 = dma.done [#allocation3], 512
    $region21: #{ncc_vxm_loss.1} parent=1 // pred_fallthru
      _
    // Predicated region
    $region22: #{ncc_vxm_loss.1} parent=1 // pred_check
      _
    $region23: #{ncc_vxm_loss.1} parent=1 // pred_check_branch
      %65 = sbr.rel (0) target = $region25
    $region24: #{ncc_vxm_loss.1} parent=1 // pred_region
      %66 = dma.done [#allocation6], 512
    $region25: #{ncc_vxm_loss.1} parent=1 // pred_fallthru
      _
    // Predicated region
    $region26: #{ncc_vxm_loss.1} parent=1 // pred_check
      _
    $region27: #{ncc_vxm_loss.1} parent=1 // pred_check_branch
      %68 = sbr.rel (0) target = $region29
    $region28: #{ncc_vxm_loss.1} parent=1 // pred_region
      %69 = dma.done [#allocation6], 2048
    $region29: #{ncc_vxm_loss.1} parent=1 // pred_fallthru
      _
    // Predicated region
    $region30: #{ncc_vxm_loss.1} parent=1 // pred_check
      _
    $region31: #{ncc_vxm_loss.1} parent=1 // pred_check_branch
      %71 = sbr.rel (0) target = $region33
    $region32: #{ncc_vxm_loss.1} parent=1 // pred_region
      %72 = dma.done [#allocation9], 256
    $region33: #{ncc_vxm_loss.1} parent=1 // pred_fallthru
      _
    %v73 = vld [vmem:[#allocation2] sm:$0xff]
    %v74 = vld [vmem:[#allocation2 + $0x8] sm:$0xff]
    %v75 = vld [vmem:[#allocation2 + $0x10] sm:$0xff]
    %v76 = vld [vmem:[#allocation2 + $0x18] sm:$0xff]
    %v77 = vld [vmem:[#allocation5] sm:$0xff]
    %v78 = vld [vmem:[#allocation5 + $0x8] sm:$0xff]
    %v79 = vld [vmem:[#allocation5 + $0x10] sm:$0xff]
    %v80 = vld [vmem:[#allocation5 + $0x18] sm:$0xff]
    %v81 = vmul.f32 %v73, %v73
    %v82 = vmul.f32 %v74, %v74
    %v83 = vmul.f32 %v75, %v75
    %v84 = vmul.f32 %v76, %v76
    %v85 = vmul.f32 %v77, %v77
    %v86 = vmul.f32 %v78, %v78
    %v87 = vmul.f32 %v79, %v79
    %v88 = vmul.f32 %v80, %v80
    %v89 = vmul.f32 %v73, %v77
    %v90 = vmul.f32 %v74, %v78
    %v91 = vmul.f32 %v75, %v79
    %v92 = vmul.f32 %v76, %v80
    %v93 = vld [vmem:[#allocation7] sm:$0xff]
    %v94 = vld [vmem:[#allocation7 + $0x8] sm:$0xff]
    %v95 = vld [vmem:[#allocation7 + $0x10] sm:$0xff]
    %v96 = vld [vmem:[#allocation7 + $0x18] sm:$0xff]
    %v97 = vld [vmem:[#allocation7 + $0x20] sm:$0xff]
    %v98 = vld [vmem:[#allocation7 + $0x28] sm:$0xff]
    %v99 = vld [vmem:[#allocation7 + $0x30] sm:$0xff]
    %v100 = vld [vmem:[#allocation7 + $0x38] sm:$0xff]
    %v101 = vld [vmem:[#allocation7 + $0x40] sm:$0xff]
    %v102 = vld [vmem:[#allocation7 + $0x48] sm:$0xff]
    %v103 = vld [vmem:[#allocation7 + $0x50] sm:$0xff]
    %v104 = vld [vmem:[#allocation7 + $0x58] sm:$0xff]
    %v105 = vld [vmem:[#allocation7 + $0x60] sm:$0xff]
    %v106 = vld [vmem:[#allocation7 + $0x68] sm:$0xff]
    %v107 = vld [vmem:[#allocation7 + $0x70] sm:$0xff]
    %v108 = vld [vmem:[#allocation7 + $0x78] sm:$0xff]
    %109 = vmatprep.subr.mxu0 0.0
    %110 = vmatpush1.msra.mxu0 %v93
    %111 = vmatprep.subr.mxu0 0.0
    %112 = vmatpush1.msra.mxu0 %v94
    %113 = vmatprep.subr.mxu0 0.0
    %114 = vmatpush1.msra.mxu0 %v95
    %115 = vmatprep.subr.mxu0 0.0
    %116 = vmatpush1.msra.mxu0 %v96
    %117 = vmatprep.subr.mxu0 0.0
    %118 = vmatpush1.msra.mxu0 %v97
    %119 = vmatprep.subr.mxu0 0.0
    %120 = vmatpush1.msra.mxu0 %v98
    %121 = vmatprep.subr.mxu0 0.0
    %122 = vmatpush1.msra.mxu0 %v99
    %123 = vmatprep.subr.mxu0 0.0
    %124 = vmatpush1.msra.mxu0 %v100
    %125 = vmatprep.subr.mxu0 0.0
    %126 = vmatpush1.msra.mxu0 %v101
    %127 = vmatprep.subr.mxu0 0.0
    %128 = vmatpush1.msra.mxu0 %v102
    %129 = vmatprep.subr.mxu0 0.0
    %130 = vmatpush1.msra.mxu0 %v103
    %131 = vmatprep.subr.mxu0 0.0
    %132 = vmatpush1.msra.mxu0 %v104
    %133 = vmatprep.subr.mxu0 0.0
    %134 = vmatpush1.msra.mxu0 %v105
    %135 = vmatprep.subr.mxu0 0.0
    %136 = vmatpush1.msra.mxu0 %v106
    %137 = vmatprep.subr.mxu0 0.0
    %138 = vmatpush1.msra.mxu0 %v107
    %139 = vmatprep.subr.mxu0 0.0
    %140 = vmatpush1.msra.mxu0 %v108
    %141 = vmatprep.subr.mxu0 0.0
    %142 = vmatpush1.msra.mxu0 0.0
    %143 = vmatprep.subr.mxu0 0.0
    %144 = vmatpush1.msra.mxu0 0.0
    %145 = vmatprep.subr.mxu0 0.0
    %146 = vmatpush1.msra.mxu0 0.0
    %147 = vmatprep.subr.mxu0 0.0
    %148 = vmatpush1.msra.mxu0 0.0
    %149 = vmatprep.subr.mxu0 0.0
    %150 = vmatpush1.msra.mxu0 0.0
    %151 = vmatprep.subr.mxu0 0.0
    %152 = vmatpush1.msra.mxu0 0.0
    %153 = vmatprep.subr.mxu0 0.0
    %154 = vmatpush1.msra.mxu0 0.0
    %155 = vmatprep.subr.mxu0 0.0
    %156 = vmatpush1.msra.mxu0 0.0
    %157 = vmatprep.subr.mxu0 0.0
    %158 = vmatpush1.msra.mxu0 0.0
    %159 = vmatprep.subr.mxu0 0.0
    %160 = vmatpush1.msra.mxu0 0.0
    %161 = vmatprep.subr.mxu0 0.0
    %162 = vmatpush1.msra.mxu0 0.0
    %163 = vmatprep.subr.mxu0 0.0
    %164 = vmatpush1.msra.mxu0 0.0
    %165 = vmatprep.subr.mxu0 0.0
    %166 = vmatpush1.msra.mxu0 0.0
    %167 = vmatprep.subr.mxu0 0.0
    %168 = vmatpush1.msra.mxu0 0.0
    %169 = vmatprep.subr.mxu0 0.0
    %170 = vmatpush1.msra.mxu0 0.0
    %171 = vmatprep.subr.mxu0 0.0
    %172 = vmatpush1.msra.mxu0 0.0
    %173 = vmatprep.mubr.f32.mxu0 0.0
    %174 = vmatmul.mubr.f32.gmra.mrb[0].mxu0 %v73
    %v175 = vpop.f32.mrb[0].mxu0
    %v176 = vadd.f32 0.0, %v175
    %v177 = vpop.f32.mrb[0].mxu0
    %178 = vmatprep.mubr.f32.mxu0 0.0
    %179 = vmatmul.mubr.f32.gmra.mrb[0].mxu0 %v74
    %v180 = vpop.f32.mrb[0].mxu0
    %v181 = vadd.f32 0.0, %v180
    %v182 = vpop.f32.mrb[0].mxu0
    %183 = vmatprep.mubr.f32.mxu0 0.0
    %184 = vmatmul.mubr.f32.gmra.mrb[0].mxu0 %v75
    %v185 = vpop.f32.mrb[0].mxu0
    %v186 = vadd.f32 0.0, %v185
    %v187 = vpop.f32.mrb[0].mxu0
    %188 = vmatprep.mubr.f32.mxu0 0.0
    %189 = vmatmul.mubr.f32.gmra.mrb[0].mxu0 %v76
    %v190 = vpop.f32.mrb[0].mxu0
    %v191 = vadd.f32 0.0, %v190
    %v192 = vpop.f32.mrb[0].mxu0
    %193 = vmatprep.mubr.f32.mxu0 0.0
    %194 = vmatmul.mubr.f32.gmra.mrb[0].mxu0 %v77
    %v195 = vpop.f32.mrb[0].mxu0
    %v196 = vadd.f32 0.0, %v195
    %v197 = vpop.f32.mrb[0].mxu0
    %198 = vmatprep.mubr.f32.mxu0 0.0
    %199 = vmatmul.mubr.f32.gmra.mrb[0].mxu0 %v78
    %v200 = vpop.f32.mrb[0].mxu0
    %v201 = vadd.f32 0.0, %v200
    %v202 = vpop.f32.mrb[0].mxu0
    %203 = vmatprep.mubr.f32.mxu0 0.0
    %204 = vmatmul.mubr.f32.gmra.mrb[0].mxu0 %v79
    %v205 = vpop.f32.mrb[0].mxu0
    %v206 = vadd.f32 0.0, %v205
    %v207 = vpop.f32.mrb[0].mxu0
    %208 = vmatprep.mubr.f32.mxu0 0.0
    %209 = vmatmul.mubr.f32.gmra.mrb[0].mxu0 %v80
    %v210 = vpop.f32.mrb[0].mxu0
    %v211 = vadd.f32 0.0, %v210
    %v212 = vpop.f32.mrb[0].mxu0
    %213 = vmatprep.mubr.f32.mxu0 0.0
    %214 = vmatmul.mubr.f32.gmra.mrb[0].mxu0 %v81
    %v215 = vpop.f32.mrb[0].mxu0
    %v216 = vadd.f32 0.0, %v215
    %v217 = vpop.f32.mrb[0].mxu0
    %218 = vmatprep.mubr.f32.mxu0 0.0
    %219 = vmatmul.mubr.f32.gmra.mrb[0].mxu0 %v82
    %v220 = vpop.f32.mrb[0].mxu0
    %v221 = vadd.f32 0.0, %v220
    %v222 = vpop.f32.mrb[0].mxu0
    %223 = vmatprep.mubr.f32.mxu0 0.0
    %224 = vmatmul.mubr.f32.gmra.mrb[0].mxu0 %v83
    %v225 = vpop.f32.mrb[0].mxu0
    %v226 = vadd.f32 0.0, %v225
    %v227 = vpop.f32.mrb[0].mxu0
    %228 = vmatprep.mubr.f32.mxu0 0.0
    %229 = vmatmul.mubr.f32.gmra.mrb[0].mxu0 %v84
    %v230 = vpop.f32.mrb[0].mxu0
    %v231 = vadd.f32 0.0, %v230
    %v232 = vpop.f32.mrb[0].mxu0
    %233 = vmatprep.mubr.f32.mxu0 0.0
    %234 = vmatmul.mubr.f32.gmra.mrb[0].mxu0 %v85
    %v235 = vpop.f32.mrb[0].mxu0
    %v236 = vadd.f32 0.0, %v235
    %v237 = vpop.f32.mrb[0].mxu0
    %238 = vmatprep.mubr.f32.mxu0 0.0
    %239 = vmatmul.mubr.f32.gmra.mrb[0].mxu0 %v86
    %v240 = vpop.f32.mrb[0].mxu0
    %v241 = vadd.f32 0.0, %v240
    %v242 = vpop.f32.mrb[0].mxu0
    %243 = vmatprep.mubr.f32.mxu0 0.0
    %244 = vmatmul.mubr.f32.gmra.mrb[0].mxu0 %v87
    %v245 = vpop.f32.mrb[0].mxu0
    %v246 = vadd.f32 0.0, %v245
    %v247 = vpop.f32.mrb[0].mxu0
    %248 = vmatprep.mubr.f32.mxu0 0.0
    %249 = vmatmul.mubr.f32.gmra.mrb[0].mxu0 %v88
    %v250 = vpop.f32.mrb[0].mxu0
    %v251 = vadd.f32 0.0, %v250
    %v252 = vpop.f32.mrb[0].mxu0
    %253 = vmatprep.mubr.f32.mxu0 0.0
    %254 = vmatmul.mubr.f32.gmra.mrb[0].mxu0 %v89
    %v255 = vpop.f32.mrb[0].mxu0
    %v256 = vadd.f32 0.0, %v255
    %v257 = vpop.f32.mrb[0].mxu0
    %258 = vmatprep.mubr.f32.mxu0 0.0
    %259 = vmatmul.mubr.f32.gmra.mrb[0].mxu0 %v90
    %v260 = vpop.f32.mrb[0].mxu0
    %v261 = vadd.f32 0.0, %v260
    %v262 = vpop.f32.mrb[0].mxu0
    %263 = vmatprep.mubr.f32.mxu0 0.0
    %264 = vmatmul.mubr.f32.gmra.mrb[0].mxu0 %v91
    %v265 = vpop.f32.mrb[0].mxu0
    %v266 = vadd.f32 0.0, %v265
    %v267 = vpop.f32.mrb[0].mxu0
    %268 = vmatprep.mubr.f32.mxu0 0.0
    %269 = vmatmul.mubr.f32.gmra.mrb[0].mxu0 %v92
    %v270 = vpop.f32.mrb[0].mxu0
    %v271 = vadd.f32 0.0, %v270
    %v272 = vpop.f32.mrb[0].mxu0
    %273 = vdwg.mxu0
    %274 = vxpose.xlu0.b32.start [1/16] %v176, 128
    %275 = vxpose.xlu0.b32.cont [2/16] %v181, 128
    %276 = vxpose.xlu0.b32.cont [3/16] 0.0, 128
    %277 = vxpose.xlu0.b32.cont [4/16] 0.0, 128
    %278 = vxpose.xlu0.b32.cont [5/16] 0.0, 128
    %279 = vxpose.xlu0.b32.cont [6/16] 0.0, 128
    %280 = vxpose.xlu0.b32.cont [7/16] 0.0, 128
    %281 = vxpose.xlu0.b32.cont [8/16] 0.0, 128
    %282 = vxpose.xlu0.b32.cont [9/16] 0.0, 128
    %283 = vxpose.xlu0.b32.cont [10/16] 0.0, 128
    %284 = vxpose.xlu0.b32.cont [11/16] 0.0, 128
    %285 = vxpose.xlu0.b32.cont [12/16] 0.0, 128
    %286 = vxpose.xlu0.b32.cont [13/16] 0.0, 128
    %287 = vxpose.xlu0.b32.cont [14/16] 0.0, 128
    %288 = vxpose.xlu0.b32.cont [15/16] 0.0, 128
    %289 = vxpose.xlu0.b32.end [16/16] 0.0, 128
    %v290 = vpop.trf.xlu0
    %v291 = vpop.trf.xlu0
    %v292 = vpop.trf.xlu0
    %v293 = vpop.trf.xlu0
    %v294 = vpop.trf.xlu0
    %v295 = vpop.trf.xlu0
    %v296 = vpop.trf.xlu0
    %v297 = vpop.trf.xlu0
    %v298 = vpop.trf.xlu0
    %v299 = vpop.trf.xlu0
    %v300 = vpop.trf.xlu0
    %v301 = vpop.trf.xlu0
    %v302 = vpop.trf.xlu0
    %v303 = vpop.trf.xlu0
    %v304 = vpop.trf.xlu0
    %v305 = vpop.trf.xlu0
    %306 = vxpose.xlu0.b32.start [1/16] %v186, 128
    %307 = vxpose.xlu0.b32.cont [2/16] %v191, 128
    %308 = vxpose.xlu0.b32.cont [3/16] 0.0, 128
    %309 = vxpose.xlu0.b32.cont [4/16] 0.0, 128
    %310 = vxpose.xlu0.b32.cont [5/16] 0.0, 128
    %311 = vxpose.xlu0.b32.cont [6/16] 0.0, 128
    %312 = vxpose.xlu0.b32.cont [7/16] 0.0, 128
    %313 = vxpose.xlu0.b32.cont [8/16] 0.0, 128
    %314 = vxpose.xlu0.b32.cont [9/16] 0.0, 128
    %315 = vxpose.xlu0.b32.cont [10/16] 0.0, 128
    %316 = vxpose.xlu0.b32.cont [11/16] 0.0, 128
    %317 = vxpose.xlu0.b32.cont [12/16] 0.0, 128
    %318 = vxpose.xlu0.b32.cont [13/16] 0.0, 128
    %319 = vxpose.xlu0.b32.cont [14/16] 0.0, 128
    %320 = vxpose.xlu0.b32.cont [15/16] 0.0, 128
    %321 = vxpose.xlu0.b32.end [16/16] 0.0, 128
    %v322 = vpop.trf.xlu0
    %v323 = vpop.trf.xlu0
    %v324 = vpop.trf.xlu0
    %v325 = vpop.trf.xlu0
    %v326 = vpop.trf.xlu0
    %v327 = vpop.trf.xlu0
    %v328 = vpop.trf.xlu0
    %v329 = vpop.trf.xlu0
    %v330 = vpop.trf.xlu0
    %v331 = vpop.trf.xlu0
    %v332 = vpop.trf.xlu0
    %v333 = vpop.trf.xlu0
    %v334 = vpop.trf.xlu0
    %v335 = vpop.trf.xlu0
    %v336 = vpop.trf.xlu0
    %v337 = vpop.trf.xlu0
    %338 = vxpose.xlu0.b32.start [1/16] %v196, 128
    %339 = vxpose.xlu0.b32.cont [2/16] %v201, 128
    %340 = vxpose.xlu0.b32.cont [3/16] 0.0, 128
    %341 = vxpose.xlu0.b32.cont [4/16] 0.0, 128
    %342 = vxpose.xlu0.b32.cont [5/16] 0.0, 128
    %343 = vxpose.xlu0.b32.cont [6/16] 0.0, 128
    %344 = vxpose.xlu0.b32.cont [7/16] 0.0, 128
    %345 = vxpose.xlu0.b32.cont [8/16] 0.0, 128
    %346 = vxpose.xlu0.b32.cont [9/16] 0.0, 128
    %347 = vxpose.xlu0.b32.cont [10/16] 0.0, 128
    %348 = vxpose.xlu0.b32.cont [11/16] 0.0, 128
    %349 = vxpose.xlu0.b32.cont [12/16] 0.0, 128
    %350 = vxpose.xlu0.b32.cont [13/16] 0.0, 128
    %351 = vxpose.xlu0.b32.cont [14/16] 0.0, 128
    %352 = vxpose.xlu0.b32.cont [15/16] 0.0, 128
    %353 = vxpose.xlu0.b32.end [16/16] 0.0, 128
    %v354 = vpop.trf.xlu0
    %v355 = vpop.trf.xlu0
    %v356 = vpop.trf.xlu0
    %v357 = vpop.trf.xlu0
    %v358 = vpop.trf.xlu0
    %v359 = vpop.trf.xlu0
    %v360 = vpop.trf.xlu0
    %v361 = vpop.trf.xlu0
    %v362 = vpop.trf.xlu0
    %v363 = vpop.trf.xlu0
    %v364 = vpop.trf.xlu0
    %v365 = vpop.trf.xlu0
    %v366 = vpop.trf.xlu0
    %v367 = vpop.trf.xlu0
    %v368 = vpop.trf.xlu0
    %v369 = vpop.trf.xlu0
    %370 = vxpose.xlu0.b32.start [1/16] %v206, 128
    %371 = vxpose.xlu0.b32.cont [2/16] %v211, 128
    %372 = vxpose.xlu0.b32.cont [3/16] 0.0, 128
    %373 = vxpose.xlu0.b32.cont [4/16] 0.0, 128
    %374 = vxpose.xlu0.b32.cont [5/16] 0.0, 128
    %375 = vxpose.xlu0.b32.cont [6/16] 0.0, 128
    %376 = vxpose.xlu0.b32.cont [7/16] 0.0, 128
    %377 = vxpose.xlu0.b32.cont [8/16] 0.0, 128
    %378 = vxpose.xlu0.b32.cont [9/16] 0.0, 128
    %379 = vxpose.xlu0.b32.cont [10/16] 0.0, 128
    %380 = vxpose.xlu0.b32.cont [11/16] 0.0, 128
    %381 = vxpose.xlu0.b32.cont [12/16] 0.0, 128
    %382 = vxpose.xlu0.b32.cont [13/16] 0.0, 128
    %383 = vxpose.xlu0.b32.cont [14/16] 0.0, 128
    %384 = vxpose.xlu0.b32.cont [15/16] 0.0, 128
    %385 = vxpose.xlu0.b32.end [16/16] 0.0, 128
    %v386 = vpop.trf.xlu0
    %v387 = vpop.trf.xlu0
    %v388 = vpop.trf.xlu0
    %v389 = vpop.trf.xlu0
    %v390 = vpop.trf.xlu0
    %v391 = vpop.trf.xlu0
    %v392 = vpop.trf.xlu0
    %v393 = vpop.trf.xlu0
    %v394 = vpop.trf.xlu0
    %v395 = vpop.trf.xlu0
    %v396 = vpop.trf.xlu0
    %v397 = vpop.trf.xlu0
    %v398 = vpop.trf.xlu0
    %v399 = vpop.trf.xlu0
    %v400 = vpop.trf.xlu0
    %v401 = vpop.trf.xlu0
    %402 = vxpose.xlu0.b32.start [1/16] %v216, 128
    %403 = vxpose.xlu0.b32.cont [2/16] %v221, 128
    %404 = vxpose.xlu0.b32.cont [3/16] 0.0, 128
    %405 = vxpose.xlu0.b32.cont [4/16] 0.0, 128
    %406 = vxpose.xlu0.b32.cont [5/16] 0.0, 128
    %407 = vxpose.xlu0.b32.cont [6/16] 0.0, 128
    %408 = vxpose.xlu0.b32.cont [7/16] 0.0, 128
    %409 = vxpose.xlu0.b32.cont [8/16] 0.0, 128
    %410 = vxpose.xlu0.b32.cont [9/16] 0.0, 128
    %411 = vxpose.xlu0.b32.cont [10/16] 0.0, 128
    %412 = vxpose.xlu0.b32.cont [11/16] 0.0, 128
    %413 = vxpose.xlu0.b32.cont [12/16] 0.0, 128
    %414 = vxpose.xlu0.b32.cont [13/16] 0.0, 128
    %415 = vxpose.xlu0.b32.cont [14/16] 0.0, 128
    %416 = vxpose.xlu0.b32.cont [15/16] 0.0, 128
    %417 = vxpose.xlu0.b32.end [16/16] 0.0, 128
    %v418 = vpop.trf.xlu0
    %v419 = vpop.trf.xlu0
    %v420 = vpop.trf.xlu0
    %v421 = vpop.trf.xlu0
    %v422 = vpop.trf.xlu0
    %v423 = vpop.trf.xlu0
    %v424 = vpop.trf.xlu0
    %v425 = vpop.trf.xlu0
    %v426 = vpop.trf.xlu0
    %v427 = vpop.trf.xlu0
    %v428 = vpop.trf.xlu0
    %v429 = vpop.trf.xlu0
    %v430 = vpop.trf.xlu0
    %v431 = vpop.trf.xlu0
    %v432 = vpop.trf.xlu0
    %v433 = vpop.trf.xlu0
    %434 = vxpose.xlu0.b32.start [1/16] %v226, 128
    %435 = vxpose.xlu0.b32.cont [2/16] %v231, 128
    %436 = vxpose.xlu0.b32.cont [3/16] 0.0, 128
    %437 = vxpose.xlu0.b32.cont [4/16] 0.0, 128
    %438 = vxpose.xlu0.b32.cont [5/16] 0.0, 128
    %439 = vxpose.xlu0.b32.cont [6/16] 0.0, 128
    %440 = vxpose.xlu0.b32.cont [7/16] 0.0, 128
    %441 = vxpose.xlu0.b32.cont [8/16] 0.0, 128
    %442 = vxpose.xlu0.b32.cont [9/16] 0.0, 128
    %443 = vxpose.xlu0.b32.cont [10/16] 0.0, 128
    %444 = vxpose.xlu0.b32.cont [11/16] 0.0, 128
    %445 = vxpose.xlu0.b32.cont [12/16] 0.0, 128
    %446 = vxpose.xlu0.b32.cont [13/16] 0.0, 128
    %447 = vxpose.xlu0.b32.cont [14/16] 0.0, 128
    %448 = vxpose.xlu0.b32.cont [15/16] 0.0, 128
    %449 = vxpose.xlu0.b32.end [16/16] 0.0, 128
    %v450 = vpop.trf.xlu0
    %v451 = vpop.trf.xlu0
    %v452 = vpop.trf.xlu0
    %v453 = vpop.trf.xlu0
    %v454 = vpop.trf.xlu0
    %v455 = vpop.trf.xlu0
    %v456 = vpop.trf.xlu0
    %v457 = vpop.trf.xlu0
    %v458 = vpop.trf.xlu0
    %v459 = vpop.trf.xlu0
    %v460 = vpop.trf.xlu0
    %v461 = vpop.trf.xlu0
    %v462 = vpop.trf.xlu0
    %v463 = vpop.trf.xlu0
    %v464 = vpop.trf.xlu0
    %v465 = vpop.trf.xlu0
    %466 = vxpose.xlu0.b32.start [1/16] %v236, 128
    %467 = vxpose.xlu0.b32.cont [2/16] %v241, 128
    %468 = vxpose.xlu0.b32.cont [3/16] 0.0, 128
    %469 = vxpose.xlu0.b32.cont [4/16] 0.0, 128
    %470 = vxpose.xlu0.b32.cont [5/16] 0.0, 128
    %471 = vxpose.xlu0.b32.cont [6/16] 0.0, 128
    %472 = vxpose.xlu0.b32.cont [7/16] 0.0, 128
    %473 = vxpose.xlu0.b32.cont [8/16] 0.0, 128
    %474 = vxpose.xlu0.b32.cont [9/16] 0.0, 128
    %475 = vxpose.xlu0.b32.cont [10/16] 0.0, 128
    %476 = vxpose.xlu0.b32.cont [11/16] 0.0, 128
    %477 = vxpose.xlu0.b32.cont [12/16] 0.0, 128
    %478 = vxpose.xlu0.b32.cont [13/16] 0.0, 128
    %479 = vxpose.xlu0.b32.cont [14/16] 0.0, 128
    %480 = vxpose.xlu0.b32.cont [15/16] 0.0, 128
    %481 = vxpose.xlu0.b32.end [16/16] 0.0, 128
    %v482 = vpop.trf.xlu0
    %v483 = vpop.trf.xlu0
    %v484 = vpop.trf.xlu0
    %v485 = vpop.trf.xlu0
    %v486 = vpop.trf.xlu0
    %v487 = vpop.trf.xlu0
    %v488 = vpop.trf.xlu0
    %v489 = vpop.trf.xlu0
    %v490 = vpop.trf.xlu0
    %v491 = vpop.trf.xlu0
    %v492 = vpop.trf.xlu0
    %v493 = vpop.trf.xlu0
    %v494 = vpop.trf.xlu0
    %v495 = vpop.trf.xlu0
    %v496 = vpop.trf.xlu0
    %v497 = vpop.trf.xlu0
    %498 = vxpose.xlu0.b32.start [1/16] %v246, 128
    %499 = vxpose.xlu0.b32.cont [2/16] %v251, 128
    %500 = vxpose.xlu0.b32.cont [3/16] 0.0, 128
    %501 = vxpose.xlu0.b32.cont [4/16] 0.0, 128
    %502 = vxpose.xlu0.b32.cont [5/16] 0.0, 128
    %503 = vxpose.xlu0.b32.cont [6/16] 0.0, 128
    %504 = vxpose.xlu0.b32.cont [7/16] 0.0, 128
    %505 = vxpose.xlu0.b32.cont [8/16] 0.0, 128
    %506 = vxpose.xlu0.b32.cont [9/16] 0.0, 128
    %507 = vxpose.xlu0.b32.cont [10/16] 0.0, 128
    %508 = vxpose.xlu0.b32.cont [11/16] 0.0, 128
    %509 = vxpose.xlu0.b32.cont [12/16] 0.0, 128
    %510 = vxpose.xlu0.b32.cont [13/16] 0.0, 128
    %511 = vxpose.xlu0.b32.cont [14/16] 0.0, 128
    %512 = vxpose.xlu0.b32.cont [15/16] 0.0, 128
    %513 = vxpose.xlu0.b32.end [16/16] 0.0, 128
    %v514 = vpop.trf.xlu0
    %v515 = vpop.trf.xlu0
    %v516 = vpop.trf.xlu0
    %v517 = vpop.trf.xlu0
    %v518 = vpop.trf.xlu0
    %v519 = vpop.trf.xlu0
    %v520 = vpop.trf.xlu0
    %v521 = vpop.trf.xlu0
    %v522 = vpop.trf.xlu0
    %v523 = vpop.trf.xlu0
    %v524 = vpop.trf.xlu0
    %v525 = vpop.trf.xlu0
    %v526 = vpop.trf.xlu0
    %v527 = vpop.trf.xlu0
    %v528 = vpop.trf.xlu0
    %v529 = vpop.trf.xlu0
    %530 = vxpose.xlu0.b32.start [1/16] %v256, 128
    %531 = vxpose.xlu0.b32.cont [2/16] %v261, 128
    %532 = vxpose.xlu0.b32.cont [3/16] 0.0, 128
    %533 = vxpose.xlu0.b32.cont [4/16] 0.0, 128
    %534 = vxpose.xlu0.b32.cont [5/16] 0.0, 128
    %535 = vxpose.xlu0.b32.cont [6/16] 0.0, 128
    %536 = vxpose.xlu0.b32.cont [7/16] 0.0, 128
    %537 = vxpose.xlu0.b32.cont [8/16] 0.0, 128
    %538 = vxpose.xlu0.b32.cont [9/16] 0.0, 128
    %539 = vxpose.xlu0.b32.cont [10/16] 0.0, 128
    %540 = vxpose.xlu0.b32.cont [11/16] 0.0, 128
    %541 = vxpose.xlu0.b32.cont [12/16] 0.0, 128
    %542 = vxpose.xlu0.b32.cont [13/16] 0.0, 128
    %543 = vxpose.xlu0.b32.cont [14/16] 0.0, 128
    %544 = vxpose.xlu0.b32.cont [15/16] 0.0, 128
    %545 = vxpose.xlu0.b32.end [16/16] 0.0, 128
    %v546 = vpop.trf.xlu0
    %v547 = vpop.trf.xlu0
    %v548 = vpop.trf.xlu0
    %v549 = vpop.trf.xlu0
    %v550 = vpop.trf.xlu0
    %v551 = vpop.trf.xlu0
    %v552 = vpop.trf.xlu0
    %v553 = vpop.trf.xlu0
    %v554 = vpop.trf.xlu0
    %v555 = vpop.trf.xlu0
    %v556 = vpop.trf.xlu0
    %v557 = vpop.trf.xlu0
    %v558 = vpop.trf.xlu0
    %v559 = vpop.trf.xlu0
    %v560 = vpop.trf.xlu0
    %v561 = vpop.trf.xlu0
    %562 = vxpose.xlu0.b32.start [1/16] %v266, 128
    %563 = vxpose.xlu0.b32.cont [2/16] %v271, 128
    %564 = vxpose.xlu0.b32.cont [3/16] 0.0, 128
    %565 = vxpose.xlu0.b32.cont [4/16] 0.0, 128
    %566 = vxpose.xlu0.b32.cont [5/16] 0.0, 128
    %567 = vxpose.xlu0.b32.cont [6/16] 0.0, 128
    %568 = vxpose.xlu0.b32.cont [7/16] 0.0, 128
    %569 = vxpose.xlu0.b32.cont [8/16] 0.0, 128
    %570 = vxpose.xlu0.b32.cont [9/16] 0.0, 128
    %571 = vxpose.xlu0.b32.cont [10/16] 0.0, 128
    %572 = vxpose.xlu0.b32.cont [11/16] 0.0, 128
    %573 = vxpose.xlu0.b32.cont [12/16] 0.0, 128
    %574 = vxpose.xlu0.b32.cont [13/16] 0.0, 128
    %575 = vxpose.xlu0.b32.cont [14/16] 0.0, 128
    %576 = vxpose.xlu0.b32.cont [15/16] 0.0, 128
    %577 = vxpose.xlu0.b32.end [16/16] 0.0, 128
    %v578 = vpop.trf.xlu0
    %v579 = vpop.trf.xlu0
    %v580 = vpop.trf.xlu0
    %v581 = vpop.trf.xlu0
    %v582 = vpop.trf.xlu0
    %v583 = vpop.trf.xlu0
    %v584 = vpop.trf.xlu0
    %v585 = vpop.trf.xlu0
    %v586 = vpop.trf.xlu0
    %v587 = vpop.trf.xlu0
    %v588 = vpop.trf.xlu0
    %v589 = vpop.trf.xlu0
    %v590 = vpop.trf.xlu0
    %v591 = vpop.trf.xlu0
    %v592 = vpop.trf.xlu0
    %v593 = vpop.trf.xlu0
    %v594 = vld [vmem:[#allocation8] sm:$0xff]
    %v595 = vld [vmem:[#allocation8 + $0x8] sm:$0xff]
    %vm596 = vcmask 130048
    %v598 = vsel %vm596, %v290, 0
    %v601 = vsel %vm596, %v291, 0
    %v604 = vsel %vm596, %v292, 0
    %v607 = vsel %vm596, %v293, 0
    %v610 = vsel %vm596, %v294, 0
    %v613 = vsel %vm596, %v295, 0
    %v616 = vsel %vm596, %v296, 0
    %v619 = vsel %vm596, %v297, 0
    %v622 = vsel %vm596, %v298, 0
    %v625 = vsel %vm596, %v299, 0
    %v628 = vsel %vm596, %v300, 0
    %v631 = vsel %vm596, %v301, 0
    %v634 = vsel %vm596, %v302, 0
    %v637 = vsel %vm596, %v303, 0
    %v640 = vsel %vm596, %v304, 0
    %v643 = vsel %vm596, %v305, 0
    %v646 = vsel %vm596, %v322, 0
    %v649 = vsel %vm596, %v323, 0
    %v652 = vsel %vm596, %v324, 0
    %v655 = vsel %vm596, %v325, 0
    %v658 = vsel %vm596, %v326, 0
    %v661 = vsel %vm596, %v327, 0
    %v664 = vsel %vm596, %v328, 0
    %v667 = vsel %vm596, %v329, 0
    %v670 = vsel %vm596, %v330, 0
    %v673 = vsel %vm596, %v331, 0
    %v676 = vsel %vm596, %v332, 0
    %v679 = vsel %vm596, %v333, 0
    %v682 = vsel %vm596, %v334, 0
    %v685 = vsel %vm596, %v335, 0
    %v688 = vsel %vm596, %v336, 0
    %v691 = vsel %vm596, %v337, 0
    %v694 = vsel %vm596, %v354, 0
    %v697 = vsel %vm596, %v355, 0
    %v700 = vsel %vm596, %v356, 0
    %v703 = vsel %vm596, %v357, 0
    %v706 = vsel %vm596, %v358, 0
    %v709 = vsel %vm596, %v359, 0
    %v712 = vsel %vm596, %v360, 0
    %v715 = vsel %vm596, %v361, 0
    %v718 = vsel %vm596, %v362, 0
    %v721 = vsel %vm596, %v363, 0
    %v724 = vsel %vm596, %v364, 0
    %v727 = vsel %vm596, %v365, 0
    %v730 = vsel %vm596, %v366, 0
    %v733 = vsel %vm596, %v367, 0
    %v736 = vsel %vm596, %v368, 0
    %v739 = vsel %vm596, %v369, 0
    %v742 = vsel %vm596, %v386, 0
    %v745 = vsel %vm596, %v387, 0
    %v748 = vsel %vm596, %v388, 0
    %v751 = vsel %vm596, %v389, 0
    %v754 = vsel %vm596, %v390, 0
    %v757 = vsel %vm596, %v391, 0
    %v760 = vsel %vm596, %v392, 0
    %v763 = vsel %vm596, %v393, 0
    %v766 = vsel %vm596, %v394, 0
    %v769 = vsel %vm596, %v395, 0
    %v772 = vsel %vm596, %v396, 0
    %v775 = vsel %vm596, %v397, 0
    %v778 = vsel %vm596, %v398, 0
    %v781 = vsel %vm596, %v399, 0
    %v784 = vsel %vm596, %v400, 0
    %v787 = vsel %vm596, %v401, 0
    %v790 = vsel %vm596, %v418, 0
    %v793 = vsel %vm596, %v419, 0
    %v796 = vsel %vm596, %v420, 0
    %v799 = vsel %vm596, %v421, 0
    %v802 = vsel %vm596, %v422, 0
    %v805 = vsel %vm596, %v423, 0
    %v808 = vsel %vm596, %v424, 0
    %v811 = vsel %vm596, %v425, 0
    %v814 = vsel %vm596, %v426, 0
    %v817 = vsel %vm596, %v427, 0
    %v820 = vsel %vm596, %v428, 0
    %v823 = vsel %vm596, %v429, 0
    %v826 = vsel %vm596, %v430, 0
    %v829 = vsel %vm596, %v431, 0
    %v832 = vsel %vm596, %v432, 0
    %v835 = vsel %vm596, %v433, 0
    %v838 = vsel %vm596, %v450, 0
    %v841 = vsel %vm596, %v451, 0
    %v844 = vsel %vm596, %v452, 0
    %v847 = vsel %vm596, %v453, 0
    %v850 = vsel %vm596, %v454, 0
    %v853 = vsel %vm596, %v455, 0
    %v856 = vsel %vm596, %v456, 0
    %v859 = vsel %vm596, %v457, 0
    %v862 = vsel %vm596, %v458, 0
    %v865 = vsel %vm596, %v459, 0
    %v868 = vsel %vm596, %v460, 0
    %v871 = vsel %vm596, %v461, 0
    %v874 = vsel %vm596, %v462, 0
    %v877 = vsel %vm596, %v463, 0
    %v880 = vsel %vm596, %v464, 0
    %v883 = vsel %vm596, %v465, 0
    %v886 = vsel %vm596, %v482, 0
    %v889 = vsel %vm596, %v483, 0
    %v892 = vsel %vm596, %v484, 0
    %v895 = vsel %vm596, %v485, 0
    %v898 = vsel %vm596, %v486, 0
    %v901 = vsel %vm596, %v487, 0
    %v904 = vsel %vm596, %v488, 0
    %v907 = vsel %vm596, %v489, 0
    %v910 = vsel %vm596, %v490, 0
    %v913 = vsel %vm596, %v491, 0
    %v916 = vsel %vm596, %v492, 0
    %v919 = vsel %vm596, %v493, 0
    %v922 = vsel %vm596, %v494, 0
    %v925 = vsel %vm596, %v495, 0
    %v928 = vsel %vm596, %v496, 0
    %v931 = vsel %vm596, %v497, 0
    %v934 = vsel %vm596, %v514, 0
    %v937 = vsel %vm596, %v515, 0
    %v940 = vsel %vm596, %v516, 0
    %v943 = vsel %vm596, %v517, 0
    %v946 = vsel %vm596, %v518, 0
    %v949 = vsel %vm596, %v519, 0
    %v952 = vsel %vm596, %v520, 0
    %v955 = vsel %vm596, %v521, 0
    %v958 = vsel %vm596, %v522, 0
    %v961 = vsel %vm596, %v523, 0
    %v964 = vsel %vm596, %v524, 0
    %v967 = vsel %vm596, %v525, 0
    %v970 = vsel %vm596, %v526, 0
    %v973 = vsel %vm596, %v527, 0
    %v976 = vsel %vm596, %v528, 0
    %v979 = vsel %vm596, %v529, 0
    %v982 = vsel %vm596, %v546, 0
    %v985 = vsel %vm596, %v547, 0
    %v988 = vsel %vm596, %v548, 0
    %v991 = vsel %vm596, %v549, 0
    %v994 = vsel %vm596, %v550, 0
    %v997 = vsel %vm596, %v551, 0
    %v1000 = vsel %vm596, %v552, 0
    %v1003 = vsel %vm596, %v553, 0
    %v1006 = vsel %vm596, %v554, 0
    %v1009 = vsel %vm596, %v555, 0
    %v1012 = vsel %vm596, %v556, 0
    %v1015 = vsel %vm596, %v557, 0
    %v1018 = vsel %vm596, %v558, 0
    %v1021 = vsel %vm596, %v559, 0
    %v1024 = vsel %vm596, %v560, 0
    %v1027 = vsel %vm596, %v561, 0
    %v1030 = vsel %vm596, %v578, 0
    %v1033 = vsel %vm596, %v579, 0
    %v1036 = vsel %vm596, %v580, 0
    %v1039 = vsel %vm596, %v581, 0
    %v1042 = vsel %vm596, %v582, 0
    %v1045 = vsel %vm596, %v583, 0
    %v1048 = vsel %vm596, %v584, 0
    %v1051 = vsel %vm596, %v585, 0
    %v1054 = vsel %vm596, %v586, 0
    %v1057 = vsel %vm596, %v587, 0
    %v1060 = vsel %vm596, %v588, 0
    %v1063 = vsel %vm596, %v589, 0
    %v1066 = vsel %vm596, %v590, 0
    %v1069 = vsel %vm596, %v591, 0
    %v1072 = vsel %vm596, %v592, 0
    %v1075 = vsel %vm596, %v593, 0
    %1077 = vmatprep.subr.mxu0 0.0
    %1078 = vmatpush1.msra.mxu0 %v594
    %1079 = vmatprep.subr.mxu0 0.0
    %1080 = vmatpush1.msra.mxu0 %v595
    %1081 = vmatprep.subr.mxu0 0.0
    %1082 = vmatpush1.msra.mxu0 0.0
    %1083 = vmatprep.subr.mxu0 0.0
    %1084 = vmatpush1.msra.mxu0 0.0
    %1085 = vmatprep.subr.mxu0 0.0
    %1086 = vmatpush1.msra.mxu0 0.0
    %1087 = vmatprep.subr.mxu0 0.0
    %1088 = vmatpush1.msra.mxu0 0.0
    %1089 = vmatprep.subr.mxu0 0.0
    %1090 = vmatpush1.msra.mxu0 0.0
    %1091 = vmatprep.subr.mxu0 0.0
    %1092 = vmatpush1.msra.mxu0 0.0
    %1093 = vmatprep.subr.mxu0 0.0
    %1094 = vmatpush1.msra.mxu0 0.0
    %1095 = vmatprep.subr.mxu0 0.0
    %1096 = vmatpush1.msra.mxu0 0.0
    %1097 = vmatprep.subr.mxu0 0.0
    %1098 = vmatpush1.msra.mxu0 0.0
    %1099 = vmatprep.subr.mxu0 0.0
    %1100 = vmatpush1.msra.mxu0 0.0
    %1101 = vmatprep.subr.mxu0 0.0
    %1102 = vmatpush1.msra.mxu0 0.0
    %1103 = vmatprep.subr.mxu0 0.0
    %1104 = vmatpush1.msra.mxu0 0.0
    %1105 = vmatprep.subr.mxu0 0.0
    %1106 = vmatpush1.msra.mxu0 0.0
    %1107 = vmatprep.subr.mxu0 0.0
    %1108 = vmatpush1.msra.mxu0 0.0
    %1109 = vmatprep.subr.mxu0 0.0
    %1110 = vmatpush1.msra.mxu0 0.0
    %1111 = vmatprep.subr.mxu0 0.0
    %1112 = vmatpush1.msra.mxu0 0.0
    %1113 = vmatprep.subr.mxu0 0.0
    %1114 = vmatpush1.msra.mxu0 0.0
    %1115 = vmatprep.subr.mxu0 0.0
    %1116 = vmatpush1.msra.mxu0 0.0
    %1117 = vmatprep.subr.mxu0 0.0
    %1118 = vmatpush1.msra.mxu0 0.0
    %1119 = vmatprep.subr.mxu0 0.0
    %1120 = vmatpush1.msra.mxu0 0.0
    %1121 = vmatprep.subr.mxu0 0.0
    %1122 = vmatpush1.msra.mxu0 0.0
    %1123 = vmatprep.subr.mxu0 0.0
    %1124 = vmatpush1.msra.mxu0 0.0
    %1125 = vmatprep.subr.mxu0 0.0
    %1126 = vmatpush1.msra.mxu0 0.0
    %1127 = vmatprep.subr.mxu0 0.0
    %1128 = vmatpush1.msra.mxu0 0.0
    %1129 = vmatprep.subr.mxu0 0.0
    %1130 = vmatpush1.msra.mxu0 0.0
    %1131 = vmatprep.subr.mxu0 0.0
    %1132 = vmatpush1.msra.mxu0 0.0
    %1133 = vmatprep.subr.mxu0 0.0
    %1134 = vmatpush1.msra.mxu0 0.0
    %1135 = vmatprep.subr.mxu0 0.0
    %1136 = vmatpush1.msra.mxu0 0.0
    %1137 = vmatprep.subr.mxu0 0.0
    %1138 = vmatpush1.msra.mxu0 0.0
    %1139 = vmatprep.subr.mxu0 0.0
    %1140 = vmatpush1.msra.mxu0 0.0
    %1141 = vmatprep.mubr.f32.mxu0 0.0
    %1142 = vmatmul.mubr.f32.gmra.mrb[0].mxu0 %v598
    %v1143 = vpop.f32.mrb[0].mxu0
    %v1144 = vadd.f32 0.0, %v1143
    %v1145 = vpop.f32.mrb[0].mxu0
    %1146 = vmatprep.mubr.f32.mxu0 0.0
    %1147 = vmatmul.mubr.f32.gmra.mrb[0].mxu0 %v601
    %v1148 = vpop.f32.mrb[0].mxu0
    %v1149 = vadd.f32 0.0, %v1148
    %v1150 = vpop.f32.mrb[0].mxu0
    %1151 = vmatprep.mubr.f32.mxu0 0.0
    %1152 = vmatmul.mubr.f32.gmra.mrb[0].mxu0 %v604
    %v1153 = vpop.f32.mrb[0].mxu0
    %v1154 = vadd.f32 0.0, %v1153
    %v1155 = vpop.f32.mrb[0].mxu0
    %1156 = vmatprep.mubr.f32.mxu0 0.0
    %1157 = vmatmul.mubr.f32.gmra.mrb[0].mxu0 %v607
    %v1158 = vpop.f32.mrb[0].mxu0
    %v1159 = vadd.f32 0.0, %v1158
    %v1160 = vpop.f32.mrb[0].mxu0
    %1161 = vmatprep.mubr.f32.mxu0 0.0
    %1162 = vmatmul.mubr.f32.gmra.mrb[0].mxu0 %v610
    %v1163 = vpop.f32.mrb[0].mxu0
    %v1164 = vadd.f32 0.0, %v1163
    %v1165 = vpop.f32.mrb[0].mxu0
    %1166 = vmatprep.mubr.f32.mxu0 0.0
    %1167 = vmatmul.mubr.f32.gmra.mrb[0].mxu0 %v613
    %v1168 = vpop.f32.mrb[0].mxu0
    %v1169 = vadd.f32 0.0, %v1168
    %v1170 = vpop.f32.mrb[0].mxu0
    %1171 = vmatprep.mubr.f32.mxu0 0.0
    %1172 = vmatmul.mubr.f32.gmra.mrb[0].mxu0 %v616
    %v1173 = vpop.f32.mrb[0].mxu0
    %v1174 = vadd.f32 0.0, %v1173
    %v1175 = vpop.f32.mrb[0].mxu0
    %1176 = vmatprep.mubr.f32.mxu0 0.0
    %1177 = vmatmul.mubr.f32.gmra.mrb[0].mxu0 %v619
    %v1178 = vpop.f32.mrb[0].mxu0
    %v1179 = vadd.f32 0.0, %v1178
    %v1180 = vpop.f32.mrb[0].mxu0
    %1181 = vmatprep.mubr.f32.mxu0 0.0
    %1182 = vmatmul.mubr.f32.gmra.mrb[0].mxu0 %v622
    %v1183 = vpop.f32.mrb[0].mxu0
    %v1184 = vadd.f32 0.0, %v1183
    %v1185 = vpop.f32.mrb[0].mxu0
    %1186 = vmatprep.mubr.f32.mxu0 0.0
    %1187 = vmatmul.mubr.f32.gmra.mrb[0].mxu0 %v625
    %v1188 = vpop.f32.mrb[0].mxu0
    %v1189 = vadd.f32 0.0, %v1188
    %v1190 = vpop.f32.mrb[0].mxu0
    %1191 = vmatprep.mubr.f32.mxu0 0.0
    %1192 = vmatmul.mubr.f32.gmra.mrb[0].mxu0 %v628
    %v1193 = vpop.f32.mrb[0].mxu0
    %v1194 = vadd.f32 0.0, %v1193
    %v1195 = vpop.f32.mrb[0].mxu0
    %1196 = vmatprep.mubr.f32.mxu0 0.0
    %1197 = vmatmul.mubr.f32.gmra.mrb[0].mxu0 %v631
    %v1198 = vpop.f32.mrb[0].mxu0
    %v1199 = vadd.f32 0.0, %v1198
    %v1200 = vpop.f32.mrb[0].mxu0
    %1201 = vmatprep.mubr.f32.mxu0 0.0
    %1202 = vmatmul.mubr.f32.gmra.mrb[0].mxu0 %v634
    %v1203 = vpop.f32.mrb[0].mxu0
    %v1204 = vadd.f32 0.0, %v1203
    %v1205 = vpop.f32.mrb[0].mxu0
    %1206 = vmatprep.mubr.f32.mxu0 0.0
    %1207 = vmatmul.mubr.f32.gmra.mrb[0].mxu0 %v637
    %v1208 = vpop.f32.mrb[0].mxu0
    %v1209 = vadd.f32 0.0, %v1208
    %v1210 = vpop.f32.mrb[0].mxu0
    %1211 = vmatprep.mubr.f32.mxu0 0.0
    %1212 = vmatmul.mubr.f32.gmra.mrb[0].mxu0 %v640
    %v1213 = vpop.f32.mrb[0].mxu0
    %v1214 = vadd.f32 0.0, %v1213
    %v1215 = vpop.f32.mrb[0].mxu0
    %1216 = vmatprep.mubr.f32.mxu0 0.0
    %1217 = vmatmul.mubr.f32.gmra.mrb[0].mxu0 %v643
    %v1218 = vpop.f32.mrb[0].mxu0
    %v1219 = vadd.f32 0.0, %v1218
    %v1220 = vpop.f32.mrb[0].mxu0
    %1221 = vmatprep.mubr.f32.mxu0 0.0
    %1222 = vmatmul.mubr.f32.gmra.mrb[0].mxu0 %v646
    %v1223 = vpop.f32.mrb[0].mxu0
    %v1224 = vadd.f32 0.0, %v1223
    %v1225 = vpop.f32.mrb[0].mxu0
    %1226 = vmatprep.mubr.f32.mxu0 0.0
    %1227 = vmatmul.mubr.f32.gmra.mrb[0].mxu0 %v649
    %v1228 = vpop.f32.mrb[0].mxu0
    %v1229 = vadd.f32 0.0, %v1228
    %v1230 = vpop.f32.mrb[0].mxu0
    %1231 = vmatprep.mubr.f32.mxu0 0.0
    %1232 = vmatmul.mubr.f32.gmra.mrb[0].mxu0 %v652
    %v1233 = vpop.f32.mrb[0].mxu0
    %v1234 = vadd.f32 0.0, %v1233
    %v1235 = vpop.f32.mrb[0].mxu0
    %1236 = vmatprep.mubr.f32.mxu0 0.0
    %1237 = vmatmul.mubr.f32.gmra.mrb[0].mxu0 %v655
    %v1238 = vpop.f32.mrb[0].mxu0
    %v1239 = vadd.f32 0.0, %v1238
    %v1240 = vpop.f32.mrb[0].mxu0
    %1241 = vmatprep.mubr.f32.mxu0 0.0
    %1242 = vmatmul.mubr.f32.gmra.mrb[0].mxu0 %v658
    %v1243 = vpop.f32.mrb[0].mxu0
    %v1244 = vadd.f32 0.0, %v1243
    %v1245 = vpop.f32.mrb[0].mxu0
    %1246 = vmatprep.mubr.f32.mxu0 0.0
    %1247 = vmatmul.mubr.f32.gmra.mrb[0].mxu0 %v661
    %v1248 = vpop.f32.mrb[0].mxu0
    %v1249 = vadd.f32 0.0, %v1248
    %v1250 = vpop.f32.mrb[0].mxu0
    %1251 = vmatprep.mubr.f32.mxu0 0.0
    %1252 = vmatmul.mubr.f32.gmra.mrb[0].mxu0 %v664
    %v1253 = vpop.f32.mrb[0].mxu0
    %v1254 = vadd.f32 0.0, %v1253
    %v1255 = vpop.f32.mrb[0].mxu0
    %1256 = vmatprep.mubr.f32.mxu0 0.0
    %1257 = vmatmul.mubr.f32.gmra.mrb[0].mxu0 %v667
    %v1258 = vpop.f32.mrb[0].mxu0
    %v1259 = vadd.f32 0.0, %v1258
    %v1260 = vpop.f32.mrb[0].mxu0
    %1261 = vmatprep.mubr.f32.mxu0 0.0
    %1262 = vmatmul.mubr.f32.gmra.mrb[0].mxu0 %v670
    %v1263 = vpop.f32.mrb[0].mxu0
    %v1264 = vadd.f32 0.0, %v1263
    %v1265 = vpop.f32.mrb[0].mxu0
    %1266 = vmatprep.mubr.f32.mxu0 0.0
    %1267 = vmatmul.mubr.f32.gmra.mrb[0].mxu0 %v673
    %v1268 = vpop.f32.mrb[0].mxu0
    %v1269 = vadd.f32 0.0, %v1268
    %v1270 = vpop.f32.mrb[0].mxu0
    %1271 = vmatprep.mubr.f32.mxu0 0.0
    %1272 = vmatmul.mubr.f32.gmra.mrb[0].mxu0 %v676
    %v1273 = vpop.f32.mrb[0].mxu0
    %v1274 = vadd.f32 0.0, %v1273
    %v1275 = vpop.f32.mrb[0].mxu0
    %1276 = vmatprep.mubr.f32.mxu0 0.0
    %1277 = vmatmul.mubr.f32.gmra.mrb[0].mxu0 %v679
    %v1278 = vpop.f32.mrb[0].mxu0
    %v1279 = vadd.f32 0.0, %v1278
    %v1280 = vpop.f32.mrb[0].mxu0
    %1281 = vmatprep.mubr.f32.mxu0 0.0
    %1282 = vmatmul.mubr.f32.gmra.mrb[0].mxu0 %v682
    %v1283 = vpop.f32.mrb[0].mxu0
    %v1284 = vadd.f32 0.0, %v1283
    %v1285 = vpop.f32.mrb[0].mxu0
    %1286 = vmatprep.mubr.f32.mxu0 0.0
    %1287 = vmatmul.mubr.f32.gmra.mrb[0].mxu0 %v685
    %v1288 = vpop.f32.mrb[0].mxu0
    %v1289 = vadd.f32 0.0, %v1288
    %v1290 = vpop.f32.mrb[0].mxu0
    %1291 = vmatprep.mubr.f32.mxu0 0.0
    %1292 = vmatmul.mubr.f32.gmra.mrb[0].mxu0 %v688
    %v1293 = vpop.f32.mrb[0].mxu0
    %v1294 = vadd.f32 0.0, %v1293
    %v1295 = vpop.f32.mrb[0].mxu0
    %1296 = vmatprep.mubr.f32.mxu0 0.0
    %1297 = vmatmul.mubr.f32.gmra.mrb[0].mxu0 %v691
    %v1298 = vpop.f32.mrb[0].mxu0
    %v1299 = vadd.f32 0.0, %v1298
    %v1300 = vpop.f32.mrb[0].mxu0
    %1301 = vmatprep.mubr.f32.mxu0 0.0
    %1302 = vmatmul.mubr.f32.gmra.mrb[0].mxu0 %v694
    %v1303 = vpop.f32.mrb[0].mxu0
    %v1304 = vadd.f32 0.0, %v1303
    %v1305 = vpop.f32.mrb[0].mxu0
    %1306 = vmatprep.mubr.f32.mxu0 0.0
    %1307 = vmatmul.mubr.f32.gmra.mrb[0].mxu0 %v697
    %v1308 = vpop.f32.mrb[0].mxu0
    %v1309 = vadd.f32 0.0, %v1308
    %v1310 = vpop.f32.mrb[0].mxu0
    %1311 = vmatprep.mubr.f32.mxu0 0.0
    %1312 = vmatmul.mubr.f32.gmra.mrb[0].mxu0 %v700
    %v1313 = vpop.f32.mrb[0].mxu0
    %v1314 = vadd.f32 0.0, %v1313
    %v1315 = vpop.f32.mrb[0].mxu0
    %1316 = vmatprep.mubr.f32.mxu0 0.0
    %1317 = vmatmul.mubr.f32.gmra.mrb[0].mxu0 %v703
    %v1318 = vpop.f32.mrb[0].mxu0
    %v1319 = vadd.f32 0.0, %v1318
    %v1320 = vpop.f32.mrb[0].mxu0
    %1321 = vmatprep.mubr.f32.mxu0 0.0
    %1322 = vmatmul.mubr.f32.gmra.mrb[0].mxu0 %v706
    %v1323 = vpop.f32.mrb[0].mxu0
    %v1324 = vadd.f32 0.0, %v1323
    %v1325 = vpop.f32.mrb[0].mxu0
    %1326 = vmatprep.mubr.f32.mxu0 0.0
    %1327 = vmatmul.mubr.f32.gmra.mrb[0].mxu0 %v709
    %v1328 = vpop.f32.mrb[0].mxu0
    %v1329 = vadd.f32 0.0, %v1328
    %v1330 = vpop.f32.mrb[0].mxu0
    %1331 = vmatprep.mubr.f32.mxu0 0.0
    %1332 = vmatmul.mubr.f32.gmra.mrb[0].mxu0 %v712
    %v1333 = vpop.f32.mrb[0].mxu0
    %v1334 = vadd.f32 0.0, %v1333
    %v1335 = vpop.f32.mrb[0].mxu0
    %1336 = vmatprep.mubr.f32.mxu0 0.0
    %1337 = vmatmul.mubr.f32.gmra.mrb[0].mxu0 %v715
    %v1338 = vpop.f32.mrb[0].mxu0
    %v1339 = vadd.f32 0.0, %v1338
    %v1340 = vpop.f32.mrb[0].mxu0
    %1341 = vmatprep.mubr.f32.mxu0 0.0
    %1342 = vmatmul.mubr.f32.gmra.mrb[0].mxu0 %v718
    %v1343 = vpop.f32.mrb[0].mxu0
    %v1344 = vadd.f32 0.0, %v1343
    %v1345 = vpop.f32.mrb[0].mxu0
    %1346 = vmatprep.mubr.f32.mxu0 0.0
    %1347 = vmatmul.mubr.f32.gmra.mrb[0].mxu0 %v721
    %v1348 = vpop.f32.mrb[0].mxu0
    %v1349 = vadd.f32 0.0, %v1348
    %v1350 = vpop.f32.mrb[0].mxu0
    %1351 = vmatprep.mubr.f32.mxu0 0.0
    %1352 = vmatmul.mubr.f32.gmra.mrb[0].mxu0 %v724
    %v1353 = vpop.f32.mrb[0].mxu0
    %v1354 = vadd.f32 0.0, %v1353
    %v1355 = vpop.f32.mrb[0].mxu0
    %1356 = vmatprep.mubr.f32.mxu0 0.0
    %1357 = vmatmul.mubr.f32.gmra.mrb[0].mxu0 %v727
    %v1358 = vpop.f32.mrb[0].mxu0
    %v1359 = vadd.f32 0.0, %v1358
    %v1360 = vpop.f32.mrb[0].mxu0
    %1361 = vmatprep.mubr.f32.mxu0 0.0
    %1362 = vmatmul.mubr.f32.gmra.mrb[0].mxu0 %v730
    %v1363 = vpop.f32.mrb[0].mxu0
    %v1364 = vadd.f32 0.0, %v1363
    %v1365 = vpop.f32.mrb[0].mxu0
    %1366 = vmatprep.mubr.f32.mxu0 0.0
    %1367 = vmatmul.mubr.f32.gmra.mrb[0].mxu0 %v733
    %v1368 = vpop.f32.mrb[0].mxu0
    %v1369 = vadd.f32 0.0, %v1368
    %v1370 = vpop.f32.mrb[0].mxu0
    %1371 = vmatprep.mubr.f32.mxu0 0.0
    %1372 = vmatmul.mubr.f32.gmra.mrb[0].mxu0 %v736
    %v1373 = vpop.f32.mrb[0].mxu0
    %v1374 = vadd.f32 0.0, %v1373
    %v1375 = vpop.f32.mrb[0].mxu0
    %1376 = vmatprep.mubr.f32.mxu0 0.0
    %1377 = vmatmul.mubr.f32.gmra.mrb[0].mxu0 %v739
    %v1378 = vpop.f32.mrb[0].mxu0
    %v1379 = vadd.f32 0.0, %v1378
    %v1380 = vpop.f32.mrb[0].mxu0
    %1381 = vmatprep.mubr.f32.mxu0 0.0
    %1382 = vmatmul.mubr.f32.gmra.mrb[0].mxu0 %v742
    %v1383 = vpop.f32.mrb[0].mxu0
    %v1384 = vadd.f32 0.0, %v1383
    %v1385 = vpop.f32.mrb[0].mxu0
    %1386 = vmatprep.mubr.f32.mxu0 0.0
    %1387 = vmatmul.mubr.f32.gmra.mrb[0].mxu0 %v745
    %v1388 = vpop.f32.mrb[0].mxu0
    %v1389 = vadd.f32 0.0, %v1388
    %v1390 = vpop.f32.mrb[0].mxu0
    %1391 = vmatprep.mubr.f32.mxu0 0.0
    %1392 = vmatmul.mubr.f32.gmra.mrb[0].mxu0 %v748
    %v1393 = vpop.f32.mrb[0].mxu0
    %v1394 = vadd.f32 0.0, %v1393
    %v1395 = vpop.f32.mrb[0].mxu0
    %1396 = vmatprep.mubr.f32.mxu0 0.0
    %1397 = vmatmul.mubr.f32.gmra.mrb[0].mxu0 %v751
    %v1398 = vpop.f32.mrb[0].mxu0
    %v1399 = vadd.f32 0.0, %v1398
    %v1400 = vpop.f32.mrb[0].mxu0
    %1401 = vmatprep.mubr.f32.mxu0 0.0
    %1402 = vmatmul.mubr.f32.gmra.mrb[0].mxu0 %v754
    %v1403 = vpop.f32.mrb[0].mxu0
    %v1404 = vadd.f32 0.0, %v1403
    %v1405 = vpop.f32.mrb[0].mxu0
    %1406 = vmatprep.mubr.f32.mxu0 0.0
    %1407 = vmatmul.mubr.f32.gmra.mrb[0].mxu0 %v757
    %v1408 = vpop.f32.mrb[0].mxu0
    %v1409 = vadd.f32 0.0, %v1408
    %v1410 = vpop.f32.mrb[0].mxu0
    %1411 = vmatprep.mubr.f32.mxu0 0.0
    %1412 = vmatmul.mubr.f32.gmra.mrb[0].mxu0 %v760
    %v1413 = vpop.f32.mrb[0].mxu0
    %v1414 = vadd.f32 0.0, %v1413
    %v1415 = vpop.f32.mrb[0].mxu0
    %1416 = vmatprep.mubr.f32.mxu0 0.0
    %1417 = vmatmul.mubr.f32.gmra.mrb[0].mxu0 %v763
    %v1418 = vpop.f32.mrb[0].mxu0
    %v1419 = vadd.f32 0.0, %v1418
    %v1420 = vpop.f32.mrb[0].mxu0
    %1421 = vmatprep.mubr.f32.mxu0 0.0
    %1422 = vmatmul.mubr.f32.gmra.mrb[0].mxu0 %v766
    %v1423 = vpop.f32.mrb[0].mxu0
    %v1424 = vadd.f32 0.0, %v1423
    %v1425 = vpop.f32.mrb[0].mxu0
    %1426 = vmatprep.mubr.f32.mxu0 0.0
    %1427 = vmatmul.mubr.f32.gmra.mrb[0].mxu0 %v769
    %v1428 = vpop.f32.mrb[0].mxu0
    %v1429 = vadd.f32 0.0, %v1428
    %v1430 = vpop.f32.mrb[0].mxu0
    %1431 = vmatprep.mubr.f32.mxu0 0.0
    %1432 = vmatmul.mubr.f32.gmra.mrb[0].mxu0 %v772
    %v1433 = vpop.f32.mrb[0].mxu0
    %v1434 = vadd.f32 0.0, %v1433
    %v1435 = vpop.f32.mrb[0].mxu0
    %1436 = vmatprep.mubr.f32.mxu0 0.0
    %1437 = vmatmul.mubr.f32.gmra.mrb[0].mxu0 %v775
    %v1438 = vpop.f32.mrb[0].mxu0
    %v1439 = vadd.f32 0.0, %v1438
    %v1440 = vpop.f32.mrb[0].mxu0
    %1441 = vmatprep.mubr.f32.mxu0 0.0
    %1442 = vmatmul.mubr.f32.gmra.mrb[0].mxu0 %v778
    %v1443 = vpop.f32.mrb[0].mxu0
    %v1444 = vadd.f32 0.0, %v1443
    %v1445 = vpop.f32.mrb[0].mxu0
    %1446 = vmatprep.mubr.f32.mxu0 0.0
    %1447 = vmatmul.mubr.f32.gmra.mrb[0].mxu0 %v781
    %v1448 = vpop.f32.mrb[0].mxu0
    %v1449 = vadd.f32 0.0, %v1448
    %v1450 = vpop.f32.mrb[0].mxu0
    %1451 = vmatprep.mubr.f32.mxu0 0.0
    %1452 = vmatmul.mubr.f32.gmra.mrb[0].mxu0 %v784
    %v1453 = vpop.f32.mrb[0].mxu0
    %v1454 = vadd.f32 0.0, %v1453
    %v1455 = vpop.f32.mrb[0].mxu0
    %1456 = vmatprep.mubr.f32.mxu0 0.0
    %1457 = vmatmul.mubr.f32.gmra.mrb[0].mxu0 %v787
    %v1458 = vpop.f32.mrb[0].mxu0
    %v1459 = vadd.f32 0.0, %v1458
    %v1460 = vpop.f32.mrb[0].mxu0
    %1461 = vmatprep.mubr.f32.mxu0 0.0
    %1462 = vmatmul.mubr.f32.gmra.mrb[0].mxu0 %v790
    %v1463 = vpop.f32.mrb[0].mxu0
    %v1464 = vadd.f32 0.0, %v1463
    %v1465 = vpop.f32.mrb[0].mxu0
    %1466 = vmatprep.mubr.f32.mxu0 0.0
    %1467 = vmatmul.mubr.f32.gmra.mrb[0].mxu0 %v793
    %v1468 = vpop.f32.mrb[0].mxu0
    %v1469 = vadd.f32 0.0, %v1468
    %v1470 = vpop.f32.mrb[0].mxu0
    %1471 = vmatprep.mubr.f32.mxu0 0.0
    %1472 = vmatmul.mubr.f32.gmra.mrb[0].mxu0 %v796
    %v1473 = vpop.f32.mrb[0].mxu0
    %v1474 = vadd.f32 0.0, %v1473
    %v1475 = vpop.f32.mrb[0].mxu0
    %1476 = vmatprep.mubr.f32.mxu0 0.0
    %1477 = vmatmul.mubr.f32.gmra.mrb[0].mxu0 %v799
    %v1478 = vpop.f32.mrb[0].mxu0
    %v1479 = vadd.f32 0.0, %v1478
    %v1480 = vpop.f32.mrb[0].mxu0
    %1481 = vmatprep.mubr.f32.mxu0 0.0
    %1482 = vmatmul.mubr.f32.gmra.mrb[0].mxu0 %v802
    %v1483 = vpop.f32.mrb[0].mxu0
    %v1484 = vadd.f32 0.0, %v1483
    %v1485 = vpop.f32.mrb[0].mxu0
    %1486 = vmatprep.mubr.f32.mxu0 0.0
    %1487 = vmatmul.mubr.f32.gmra.mrb[0].mxu0 %v805
    %v1488 = vpop.f32.mrb[0].mxu0
    %v1489 = vadd.f32 0.0, %v1488
    %v1490 = vpop.f32.mrb[0].mxu0
    %1491 = vmatprep.mubr.f32.mxu0 0.0
    %1492 = vmatmul.mubr.f32.gmra.mrb[0].mxu0 %v808
    %v1493 = vpop.f32.mrb[0].mxu0
    %v1494 = vadd.f32 0.0, %v1493
    %v1495 = vpop.f32.mrb[0].mxu0
    %1496 = vmatprep.mubr.f32.mxu0 0.0
    %1497 = vmatmul.mubr.f32.gmra.mrb[0].mxu0 %v811
    %v1498 = vpop.f32.mrb[0].mxu0
    %v1499 = vadd.f32 0.0, %v1498
    %v1500 = vpop.f32.mrb[0].mxu0
    %1501 = vmatprep.mubr.f32.mxu0 0.0
    %1502 = vmatmul.mubr.f32.gmra.mrb[0].mxu0 %v814
    %v1503 = vpop.f32.mrb[0].mxu0
    %v1504 = vadd.f32 0.0, %v1503
    %v1505 = vpop.f32.mrb[0].mxu0
    %1506 = vmatprep.mubr.f32.mxu0 0.0
    %1507 = vmatmul.mubr.f32.gmra.mrb[0].mxu0 %v817
    %v1508 = vpop.f32.mrb[0].mxu0
    %v1509 = vadd.f32 0.0, %v1508
    %v1510 = vpop.f32.mrb[0].mxu0
    %1511 = vmatprep.mubr.f32.mxu0 0.0
    %1512 = vmatmul.mubr.f32.gmra.mrb[0].mxu0 %v820
    %v1513 = vpop.f32.mrb[0].mxu0
    %v1514 = vadd.f32 0.0, %v1513
    %v1515 = vpop.f32.mrb[0].mxu0
    %1516 = vmatprep.mubr.f32.mxu0 0.0
    %1517 = vmatmul.mubr.f32.gmra.mrb[0].mxu0 %v823
    %v1518 = vpop.f32.mrb[0].mxu0
    %v1519 = vadd.f32 0.0, %v1518
    %v1520 = vpop.f32.mrb[0].mxu0
    %1521 = vmatprep.mubr.f32.mxu0 0.0
    %1522 = vmatmul.mubr.f32.gmra.mrb[0].mxu0 %v826
    %v1523 = vpop.f32.mrb[0].mxu0
    %v1524 = vadd.f32 0.0, %v1523
    %v1525 = vpop.f32.mrb[0].mxu0
    %1526 = vmatprep.mubr.f32.mxu0 0.0
    %1527 = vmatmul.mubr.f32.gmra.mrb[0].mxu0 %v829
    %v1528 = vpop.f32.mrb[0].mxu0
    %v1529 = vadd.f32 0.0, %v1528
    %v1530 = vpop.f32.mrb[0].mxu0
    %1531 = vmatprep.mubr.f32.mxu0 0.0
    %1532 = vmatmul.mubr.f32.gmra.mrb[0].mxu0 %v832
    %v1533 = vpop.f32.mrb[0].mxu0
    %v1534 = vadd.f32 0.0, %v1533
    %v1535 = vpop.f32.mrb[0].mxu0
    %1536 = vmatprep.mubr.f32.mxu0 0.0
    %1537 = vmatmul.mubr.f32.gmra.mrb[0].mxu0 %v835
    %v1538 = vpop.f32.mrb[0].mxu0
    %v1539 = vadd.f32 0.0, %v1538
    %v1540 = vpop.f32.mrb[0].mxu0
    %1541 = vmatprep.mubr.f32.mxu0 0.0
    %1542 = vmatmul.mubr.f32.gmra.mrb[0].mxu0 %v838
    %v1543 = vpop.f32.mrb[0].mxu0
    %v1544 = vadd.f32 0.0, %v1543
    %v1545 = vpop.f32.mrb[0].mxu0
    %1546 = vmatprep.mubr.f32.mxu0 0.0
    %1547 = vmatmul.mubr.f32.gmra.mrb[0].mxu0 %v841
    %v1548 = vpop.f32.mrb[0].mxu0
    %v1549 = vadd.f32 0.0, %v1548
    %v1550 = vpop.f32.mrb[0].mxu0
    %1551 = vmatprep.mubr.f32.mxu0 0.0
    %1552 = vmatmul.mubr.f32.gmra.mrb[0].mxu0 %v844
    %v1553 = vpop.f32.mrb[0].mxu0
    %v1554 = vadd.f32 0.0, %v1553
    %v1555 = vpop.f32.mrb[0].mxu0
    %1556 = vmatprep.mubr.f32.mxu0 0.0
    %1557 = vmatmul.mubr.f32.gmra.mrb[0].mxu0 %v847
    %v1558 = vpop.f32.mrb[0].mxu0
    %v1559 = vadd.f32 0.0, %v1558
    %v1560 = vpop.f32.mrb[0].mxu0
    %1561 = vmatprep.mubr.f32.mxu0 0.0
    %1562 = vmatmul.mubr.f32.gmra.mrb[0].mxu0 %v850
    %v1563 = vpop.f32.mrb[0].mxu0
    %v1564 = vadd.f32 0.0, %v1563
    %v1565 = vpop.f32.mrb[0].mxu0
    %1566 = vmatprep.mubr.f32.mxu0 0.0
    %1567 = vmatmul.mubr.f32.gmra.mrb[0].mxu0 %v853
    %v1568 = vpop.f32.mrb[0].mxu0
    %v1569 = vadd.f32 0.0, %v1568
    %v1570 = vpop.f32.mrb[0].mxu0
    %1571 = vmatprep.mubr.f32.mxu0 0.0
    %1572 = vmatmul.mubr.f32.gmra.mrb[0].mxu0 %v856
    %v1573 = vpop.f32.mrb[0].mxu0
    %v1574 = vadd.f32 0.0, %v1573
    %v1575 = vpop.f32.mrb[0].mxu0
    %1576 = vmatprep.mubr.f32.mxu0 0.0
    %1577 = vmatmul.mubr.f32.gmra.mrb[0].mxu0 %v859
    %v1578 = vpop.f32.mrb[0].mxu0
    %v1579 = vadd.f32 0.0, %v1578
    %v1580 = vpop.f32.mrb[0].mxu0
    %1581 = vmatprep.mubr.f32.mxu0 0.0
    %1582 = vmatmul.mubr.f32.gmra.mrb[0].mxu0 %v862
    %v1583 = vpop.f32.mrb[0].mxu0
    %v1584 = vadd.f32 0.0, %v1583
    %v1585 = vpop.f32.mrb[0].mxu0
    %1586 = vmatprep.mubr.f32.mxu0 0.0
    %1587 = vmatmul.mubr.f32.gmra.mrb[0].mxu0 %v865
    %v1588 = vpop.f32.mrb[0].mxu0
    %v1589 = vadd.f32 0.0, %v1588
    %v1590 = vpop.f32.mrb[0].mxu0
    %1591 = vmatprep.mubr.f32.mxu0 0.0
    %1592 = vmatmul.mubr.f32.gmra.mrb[0].mxu0 %v868
    %v1593 = vpop.f32.mrb[0].mxu0
    %v1594 = vadd.f32 0.0, %v1593
    %v1595 = vpop.f32.mrb[0].mxu0
    %1596 = vmatprep.mubr.f32.mxu0 0.0
    %1597 = vmatmul.mubr.f32.gmra.mrb[0].mxu0 %v871
    %v1598 = vpop.f32.mrb[0].mxu0
    %v1599 = vadd.f32 0.0, %v1598
    %v1600 = vpop.f32.mrb[0].mxu0
    %1601 = vmatprep.mubr.f32.mxu0 0.0
    %1602 = vmatmul.mubr.f32.gmra.mrb[0].mxu0 %v874
    %v1603 = vpop.f32.mrb[0].mxu0
    %v1604 = vadd.f32 0.0, %v1603
    %v1605 = vpop.f32.mrb[0].mxu0
    %1606 = vmatprep.mubr.f32.mxu0 0.0
    %1607 = vmatmul.mubr.f32.gmra.mrb[0].mxu0 %v877
    %v1608 = vpop.f32.mrb[0].mxu0
    %v1609 = vadd.f32 0.0, %v1608
    %v1610 = vpop.f32.mrb[0].mxu0
    %1611 = vmatprep.mubr.f32.mxu0 0.0
    %1612 = vmatmul.mubr.f32.gmra.mrb[0].mxu0 %v880
    %v1613 = vpop.f32.mrb[0].mxu0
    %v1614 = vadd.f32 0.0, %v1613
    %v1615 = vpop.f32.mrb[0].mxu0
    %1616 = vmatprep.mubr.f32.mxu0 0.0
    %1617 = vmatmul.mubr.f32.gmra.mrb[0].mxu0 %v883
    %v1618 = vpop.f32.mrb[0].mxu0
    %v1619 = vadd.f32 0.0, %v1618
    %v1620 = vpop.f32.mrb[0].mxu0
    %1621 = vmatprep.mubr.f32.mxu0 0.0
    %1622 = vmatmul.mubr.f32.gmra.mrb[0].mxu0 %v886
    %v1623 = vpop.f32.mrb[0].mxu0
    %v1624 = vadd.f32 0.0, %v1623
    %v1625 = vpop.f32.mrb[0].mxu0
    %1626 = vmatprep.mubr.f32.mxu0 0.0
    %1627 = vmatmul.mubr.f32.gmra.mrb[0].mxu0 %v889
    %v1628 = vpop.f32.mrb[0].mxu0
    %v1629 = vadd.f32 0.0, %v1628
    %v1630 = vpop.f32.mrb[0].mxu0
    %1631 = vmatprep.mubr.f32.mxu0 0.0
    %1632 = vmatmul.mubr.f32.gmra.mrb[0].mxu0 %v892
    %v1633 = vpop.f32.mrb[0].mxu0
    %v1634 = vadd.f32 0.0, %v1633
    %v1635 = vpop.f32.mrb[0].mxu0
    %1636 = vmatprep.mubr.f32.mxu0 0.0
    %1637 = vmatmul.mubr.f32.gmra.mrb[0].mxu0 %v895
    %v1638 = vpop.f32.mrb[0].mxu0
    %v1639 = vadd.f32 0.0, %v1638
    %v1640 = vpop.f32.mrb[0].mxu0
    %1641 = vmatprep.mubr.f32.mxu0 0.0
    %1642 = vmatmul.mubr.f32.gmra.mrb[0].mxu0 %v898
    %v1643 = vpop.f32.mrb[0].mxu0
    %v1644 = vadd.f32 0.0, %v1643
    %v1645 = vpop.f32.mrb[0].mxu0
    %1646 = vmatprep.mubr.f32.mxu0 0.0
    %1647 = vmatmul.mubr.f32.gmra.mrb[0].mxu0 %v901
    %v1648 = vpop.f32.mrb[0].mxu0
    %v1649 = vadd.f32 0.0, %v1648
    %v1650 = vpop.f32.mrb[0].mxu0
    %1651 = vmatprep.mubr.f32.mxu0 0.0
    %1652 = vmatmul.mubr.f32.gmra.mrb[0].mxu0 %v904
    %v1653 = vpop.f32.mrb[0].mxu0
    %v1654 = vadd.f32 0.0, %v1653
    %v1655 = vpop.f32.mrb[0].mxu0
    %1656 = vmatprep.mubr.f32.mxu0 0.0
    %1657 = vmatmul.mubr.f32.gmra.mrb[0].mxu0 %v907
    %v1658 = vpop.f32.mrb[0].mxu0
    %v1659 = vadd.f32 0.0, %v1658
    %v1660 = vpop.f32.mrb[0].mxu0
    %1661 = vmatprep.mubr.f32.mxu0 0.0
    %1662 = vmatmul.mubr.f32.gmra.mrb[0].mxu0 %v910
    %v1663 = vpop.f32.mrb[0].mxu0
    %v1664 = vadd.f32 0.0, %v1663
    %v1665 = vpop.f32.mrb[0].mxu0
    %1666 = vmatprep.mubr.f32.mxu0 0.0
    %1667 = vmatmul.mubr.f32.gmra.mrb[0].mxu0 %v913
    %v1668 = vpop.f32.mrb[0].mxu0
    %v1669 = vadd.f32 0.0, %v1668
    %v1670 = vpop.f32.mrb[0].mxu0
    %1671 = vmatprep.mubr.f32.mxu0 0.0
    %1672 = vmatmul.mubr.f32.gmra.mrb[0].mxu0 %v916
    %v1673 = vpop.f32.mrb[0].mxu0
    %v1674 = vadd.f32 0.0, %v1673
    %v1675 = vpop.f32.mrb[0].mxu0
    %1676 = vmatprep.mubr.f32.mxu0 0.0
    %1677 = vmatmul.mubr.f32.gmra.mrb[0].mxu0 %v919
    %v1678 = vpop.f32.mrb[0].mxu0
    %v1679 = vadd.f32 0.0, %v1678
    %v1680 = vpop.f32.mrb[0].mxu0
    %1681 = vmatprep.mubr.f32.mxu0 0.0
    %1682 = vmatmul.mubr.f32.gmra.mrb[0].mxu0 %v922
    %v1683 = vpop.f32.mrb[0].mxu0
    %v1684 = vadd.f32 0.0, %v1683
    %v1685 = vpop.f32.mrb[0].mxu0
    %1686 = vmatprep.mubr.f32.mxu0 0.0
    %1687 = vmatmul.mubr.f32.gmra.mrb[0].mxu0 %v925
    %v1688 = vpop.f32.mrb[0].mxu0
    %v1689 = vadd.f32 0.0, %v1688
    %v1690 = vpop.f32.mrb[0].mxu0
    %1691 = vmatprep.mubr.f32.mxu0 0.0
    %1692 = vmatmul.mubr.f32.gmra.mrb[0].mxu0 %v928
    %v1693 = vpop.f32.mrb[0].mxu0
    %v1694 = vadd.f32 0.0, %v1693
    %v1695 = vpop.f32.mrb[0].mxu0
    %1696 = vmatprep.mubr.f32.mxu0 0.0
    %1697 = vmatmul.mubr.f32.gmra.mrb[0].mxu0 %v931
    %v1698 = vpop.f32.mrb[0].mxu0
    %v1699 = vadd.f32 0.0, %v1698
    %v1700 = vpop.f32.mrb[0].mxu0
    %1701 = vmatprep.mubr.f32.mxu0 0.0
    %1702 = vmatmul.mubr.f32.gmra.mrb[0].mxu0 %v934
    %v1703 = vpop.f32.mrb[0].mxu0
    %v1704 = vadd.f32 0.0, %v1703
    %v1705 = vpop.f32.mrb[0].mxu0
    %1706 = vmatprep.mubr.f32.mxu0 0.0
    %1707 = vmatmul.mubr.f32.gmra.mrb[0].mxu0 %v937
    %v1708 = vpop.f32.mrb[0].mxu0
    %v1709 = vadd.f32 0.0, %v1708
    %v1710 = vpop.f32.mrb[0].mxu0
    %1711 = vmatprep.mubr.f32.mxu0 0.0
    %1712 = vmatmul.mubr.f32.gmra.mrb[0].mxu0 %v940
    %v1713 = vpop.f32.mrb[0].mxu0
    %v1714 = vadd.f32 0.0, %v1713
    %v1715 = vpop.f32.mrb[0].mxu0
    %1716 = vmatprep.mubr.f32.mxu0 0.0
    %1717 = vmatmul.mubr.f32.gmra.mrb[0].mxu0 %v943
    %v1718 = vpop.f32.mrb[0].mxu0
    %v1719 = vadd.f32 0.0, %v1718
    %v1720 = vpop.f32.mrb[0].mxu0
    %1721 = vmatprep.mubr.f32.mxu0 0.0
    %1722 = vmatmul.mubr.f32.gmra.mrb[0].mxu0 %v946
    %v1723 = vpop.f32.mrb[0].mxu0
    %v1724 = vadd.f32 0.0, %v1723
    %v1725 = vpop.f32.mrb[0].mxu0
    %1726 = vmatprep.mubr.f32.mxu0 0.0
    %1727 = vmatmul.mubr.f32.gmra.mrb[0].mxu0 %v949
    %v1728 = vpop.f32.mrb[0].mxu0
    %v1729 = vadd.f32 0.0, %v1728
    %v1730 = vpop.f32.mrb[0].mxu0
    %1731 = vmatprep.mubr.f32.mxu0 0.0
    %1732 = vmatmul.mubr.f32.gmra.mrb[0].mxu0 %v952
    %v1733 = vpop.f32.mrb[0].mxu0
    %v1734 = vadd.f32 0.0, %v1733
    %v1735 = vpop.f32.mrb[0].mxu0
    %1736 = vmatprep.mubr.f32.mxu0 0.0
    %1737 = vmatmul.mubr.f32.gmra.mrb[0].mxu0 %v955
    %v1738 = vpop.f32.mrb[0].mxu0
    %v1739 = vadd.f32 0.0, %v1738
    %v1740 = vpop.f32.mrb[0].mxu0
    %1741 = vmatprep.mubr.f32.mxu0 0.0
    %1742 = vmatmul.mubr.f32.gmra.mrb[0].mxu0 %v958
    %v1743 = vpop.f32.mrb[0].mxu0
    %v1744 = vadd.f32 0.0, %v1743
    %v1745 = vpop.f32.mrb[0].mxu0
    %1746 = vmatprep.mubr.f32.mxu0 0.0
    %1747 = vmatmul.mubr.f32.gmra.mrb[0].mxu0 %v961
    %v1748 = vpop.f32.mrb[0].mxu0
    %v1749 = vadd.f32 0.0, %v1748
    %v1750 = vpop.f32.mrb[0].mxu0
    %1751 = vmatprep.mubr.f32.mxu0 0.0
    %1752 = vmatmul.mubr.f32.gmra.mrb[0].mxu0 %v964
    %v1753 = vpop.f32.mrb[0].mxu0
    %v1754 = vadd.f32 0.0, %v1753
    %v1755 = vpop.f32.mrb[0].mxu0
    %1756 = vmatprep.mubr.f32.mxu0 0.0
    %1757 = vmatmul.mubr.f32.gmra.mrb[0].mxu0 %v967
    %v1758 = vpop.f32.mrb[0].mxu0
    %v1759 = vadd.f32 0.0, %v1758
    %v1760 = vpop.f32.mrb[0].mxu0
    %1761 = vmatprep.mubr.f32.mxu0 0.0
    %1762 = vmatmul.mubr.f32.gmra.mrb[0].mxu0 %v970
    %v1763 = vpop.f32.mrb[0].mxu0
    %v1764 = vadd.f32 0.0, %v1763
    %v1765 = vpop.f32.mrb[0].mxu0
    %1766 = vmatprep.mubr.f32.mxu0 0.0
    %1767 = vmatmul.mubr.f32.gmra.mrb[0].mxu0 %v973
    %v1768 = vpop.f32.mrb[0].mxu0
    %v1769 = vadd.f32 0.0, %v1768
    %v1770 = vpop.f32.mrb[0].mxu0
    %1771 = vmatprep.mubr.f32.mxu0 0.0
    %1772 = vmatmul.mubr.f32.gmra.mrb[0].mxu0 %v976
    %v1773 = vpop.f32.mrb[0].mxu0
    %v1774 = vadd.f32 0.0, %v1773
    %v1775 = vpop.f32.mrb[0].mxu0
    %1776 = vmatprep.mubr.f32.mxu0 0.0
    %1777 = vmatmul.mubr.f32.gmra.mrb[0].mxu0 %v979
    %v1778 = vpop.f32.mrb[0].mxu0
    %v1779 = vadd.f32 0.0, %v1778
    %v1780 = vpop.f32.mrb[0].mxu0
    %1781 = vmatprep.mubr.f32.mxu0 0.0
    %1782 = vmatmul.mubr.f32.gmra.mrb[0].mxu0 %v982
    %v1783 = vpop.f32.mrb[0].mxu0
    %v1784 = vadd.f32 0.0, %v1783
    %v1785 = vpop.f32.mrb[0].mxu0
    %1786 = vmatprep.mubr.f32.mxu0 0.0
    %1787 = vmatmul.mubr.f32.gmra.mrb[0].mxu0 %v985
    %v1788 = vpop.f32.mrb[0].mxu0
    %v1789 = vadd.f32 0.0, %v1788
    %v1790 = vpop.f32.mrb[0].mxu0
    %1791 = vmatprep.mubr.f32.mxu0 0.0
    %1792 = vmatmul.mubr.f32.gmra.mrb[0].mxu0 %v988
    %v1793 = vpop.f32.mrb[0].mxu0
    %v1794 = vadd.f32 0.0, %v1793
    %v1795 = vpop.f32.mrb[0].mxu0
    %1796 = vmatprep.mubr.f32.mxu0 0.0
    %1797 = vmatmul.mubr.f32.gmra.mrb[0].mxu0 %v991
    %v1798 = vpop.f32.mrb[0].mxu0
    %v1799 = vadd.f32 0.0, %v1798
    %v1800 = vpop.f32.mrb[0].mxu0
    %1801 = vmatprep.mubr.f32.mxu0 0.0
    %1802 = vmatmul.mubr.f32.gmra.mrb[0].mxu0 %v994
    %v1803 = vpop.f32.mrb[0].mxu0
    %v1804 = vadd.f32 0.0, %v1803
    %v1805 = vpop.f32.mrb[0].mxu0
    %1806 = vmatprep.mubr.f32.mxu0 0.0
    %1807 = vmatmul.mubr.f32.gmra.mrb[0].mxu0 %v997
    %v1808 = vpop.f32.mrb[0].mxu0
    %v1809 = vadd.f32 0.0, %v1808
    %v1810 = vpop.f32.mrb[0].mxu0
    %1811 = vmatprep.mubr.f32.mxu0 0.0
    %1812 = vmatmul.mubr.f32.gmra.mrb[0].mxu0 %v1000
    %v1813 = vpop.f32.mrb[0].mxu0
    %v1814 = vadd.f32 0.0, %v1813
    %v1815 = vpop.f32.mrb[0].mxu0
    %1816 = vmatprep.mubr.f32.mxu0 0.0
    %1817 = vmatmul.mubr.f32.gmra.mrb[0].mxu0 %v1003
    %v1818 = vpop.f32.mrb[0].mxu0
    %v1819 = vadd.f32 0.0, %v1818
    %v1820 = vpop.f32.mrb[0].mxu0
    %1821 = vmatprep.mubr.f32.mxu0 0.0
    %1822 = vmatmul.mubr.f32.gmra.mrb[0].mxu0 %v1006
    %v1823 = vpop.f32.mrb[0].mxu0
    %v1824 = vadd.f32 0.0, %v1823
    %v1825 = vpop.f32.mrb[0].mxu0
    %1826 = vmatprep.mubr.f32.mxu0 0.0
    %1827 = vmatmul.mubr.f32.gmra.mrb[0].mxu0 %v1009
    %v1828 = vpop.f32.mrb[0].mxu0
    %v1829 = vadd.f32 0.0, %v1828
    %v1830 = vpop.f32.mrb[0].mxu0
    %1831 = vmatprep.mubr.f32.mxu0 0.0
    %1832 = vmatmul.mubr.f32.gmra.mrb[0].mxu0 %v1012
    %v1833 = vpop.f32.mrb[0].mxu0
    %v1834 = vadd.f32 0.0, %v1833
    %v1835 = vpop.f32.mrb[0].mxu0
    %1836 = vmatprep.mubr.f32.mxu0 0.0
    %1837 = vmatmul.mubr.f32.gmra.mrb[0].mxu0 %v1015
    %v1838 = vpop.f32.mrb[0].mxu0
    %v1839 = vadd.f32 0.0, %v1838
    %v1840 = vpop.f32.mrb[0].mxu0
    %1841 = vmatprep.mubr.f32.mxu0 0.0
    %1842 = vmatmul.mubr.f32.gmra.mrb[0].mxu0 %v1018
    %v1843 = vpop.f32.mrb[0].mxu0
    %v1844 = vadd.f32 0.0, %v1843
    %v1845 = vpop.f32.mrb[0].mxu0
    %1846 = vmatprep.mubr.f32.mxu0 0.0
    %1847 = vmatmul.mubr.f32.gmra.mrb[0].mxu0 %v1021
    %v1848 = vpop.f32.mrb[0].mxu0
    %v1849 = vadd.f32 0.0, %v1848
    %v1850 = vpop.f32.mrb[0].mxu0
    %1851 = vmatprep.mubr.f32.mxu0 0.0
    %1852 = vmatmul.mubr.f32.gmra.mrb[0].mxu0 %v1024
    %v1853 = vpop.f32.mrb[0].mxu0
    %v1854 = vadd.f32 0.0, %v1853
    %v1855 = vpop.f32.mrb[0].mxu0
    %1856 = vmatprep.mubr.f32.mxu0 0.0
    %1857 = vmatmul.mubr.f32.gmra.mrb[0].mxu0 %v1027
    %v1858 = vpop.f32.mrb[0].mxu0
    %v1859 = vadd.f32 0.0, %v1858
    %v1860 = vpop.f32.mrb[0].mxu0
    %1861 = vmatprep.mubr.f32.mxu0 0.0
    %1862 = vmatmul.mubr.f32.gmra.mrb[0].mxu0 %v1030
    %v1863 = vpop.f32.mrb[0].mxu0
    %v1864 = vadd.f32 0.0, %v1863
    %v1865 = vpop.f32.mrb[0].mxu0
    %1866 = vmatprep.mubr.f32.mxu0 0.0
    %1867 = vmatmul.mubr.f32.gmra.mrb[0].mxu0 %v1033
    %v1868 = vpop.f32.mrb[0].mxu0
    %v1869 = vadd.f32 0.0, %v1868
    %v1870 = vpop.f32.mrb[0].mxu0
    %1871 = vmatprep.mubr.f32.mxu0 0.0
    %1872 = vmatmul.mubr.f32.gmra.mrb[0].mxu0 %v1036
    %v1873 = vpop.f32.mrb[0].mxu0
    %v1874 = vadd.f32 0.0, %v1873
    %v1875 = vpop.f32.mrb[0].mxu0
    %1876 = vmatprep.mubr.f32.mxu0 0.0
    %1877 = vmatmul.mubr.f32.gmra.mrb[0].mxu0 %v1039
    %v1878 = vpop.f32.mrb[0].mxu0
    %v1879 = vadd.f32 0.0, %v1878
    %v1880 = vpop.f32.mrb[0].mxu0
    %1881 = vmatprep.mubr.f32.mxu0 0.0
    %1882 = vmatmul.mubr.f32.gmra.mrb[0].mxu0 %v1042
    %v1883 = vpop.f32.mrb[0].mxu0
    %v1884 = vadd.f32 0.0, %v1883
    %v1885 = vpop.f32.mrb[0].mxu0
    %1886 = vmatprep.mubr.f32.mxu0 0.0
    %1887 = vmatmul.mubr.f32.gmra.mrb[0].mxu0 %v1045
    %v1888 = vpop.f32.mrb[0].mxu0
    %v1889 = vadd.f32 0.0, %v1888
    %v1890 = vpop.f32.mrb[0].mxu0
    %1891 = vmatprep.mubr.f32.mxu0 0.0
    %1892 = vmatmul.mubr.f32.gmra.mrb[0].mxu0 %v1048
    %v1893 = vpop.f32.mrb[0].mxu0
    %v1894 = vadd.f32 0.0, %v1893
    %v1895 = vpop.f32.mrb[0].mxu0
    %1896 = vmatprep.mubr.f32.mxu0 0.0
    %1897 = vmatmul.mubr.f32.gmra.mrb[0].mxu0 %v1051
    %v1898 = vpop.f32.mrb[0].mxu0
    %v1899 = vadd.f32 0.0, %v1898
    %v1900 = vpop.f32.mrb[0].mxu0
    %1901 = vmatprep.mubr.f32.mxu0 0.0
    %1902 = vmatmul.mubr.f32.gmra.mrb[0].mxu0 %v1054
    %v1903 = vpop.f32.mrb[0].mxu0
    %v1904 = vadd.f32 0.0, %v1903
    %v1905 = vpop.f32.mrb[0].mxu0
    %1906 = vmatprep.mubr.f32.mxu0 0.0
    %1907 = vmatmul.mubr.f32.gmra.mrb[0].mxu0 %v1057
    %v1908 = vpop.f32.mrb[0].mxu0
    %v1909 = vadd.f32 0.0, %v1908
    %v1910 = vpop.f32.mrb[0].mxu0
    %1911 = vmatprep.mubr.f32.mxu0 0.0
    %1912 = vmatmul.mubr.f32.gmra.mrb[0].mxu0 %v1060
    %v1913 = vpop.f32.mrb[0].mxu0
    %v1914 = vadd.f32 0.0, %v1913
    %v1915 = vpop.f32.mrb[0].mxu0
    %1916 = vmatprep.mubr.f32.mxu0 0.0
    %1917 = vmatmul.mubr.f32.gmra.mrb[0].mxu0 %v1063
    %v1918 = vpop.f32.mrb[0].mxu0
    %v1919 = vadd.f32 0.0, %v1918
    %v1920 = vpop.f32.mrb[0].mxu0
    %1921 = vmatprep.mubr.f32.mxu0 0.0
    %1922 = vmatmul.mubr.f32.gmra.mrb[0].mxu0 %v1066
    %v1923 = vpop.f32.mrb[0].mxu0
    %v1924 = vadd.f32 0.0, %v1923
    %v1925 = vpop.f32.mrb[0].mxu0
    %1926 = vmatprep.mubr.f32.mxu0 0.0
    %1927 = vmatmul.mubr.f32.gmra.mrb[0].mxu0 %v1069
    %v1928 = vpop.f32.mrb[0].mxu0
    %v1929 = vadd.f32 0.0, %v1928
    %v1930 = vpop.f32.mrb[0].mxu0
    %1931 = vmatprep.mubr.f32.mxu0 0.0
    %1932 = vmatmul.mubr.f32.gmra.mrb[0].mxu0 %v1072
    %v1933 = vpop.f32.mrb[0].mxu0
    %v1934 = vadd.f32 0.0, %v1933
    %v1935 = vpop.f32.mrb[0].mxu0
    %1936 = vmatprep.mubr.f32.mxu0 0.0
    %1937 = vmatmul.mubr.f32.gmra.mrb[0].mxu0 %v1075
    %v1938 = vpop.f32.mrb[0].mxu0
    %v1939 = vadd.f32 0.0, %v1938
    %v1940 = vpop.f32.mrb[0].mxu0
    %1941 = vdwg.mxu0
    %v1942 = vmul.f32 %v1144, 0.012345679
    %v1943 = vmul.f32 %v1149, 0.012345679
    %v1944 = vmul.f32 %v1154, 0.012345679
    %v1945 = vmul.f32 %v1159, 0.012345679
    %v1946 = vmul.f32 %v1164, 0.012345679
    %v1947 = vmul.f32 %v1169, 0.012345679
    %v1948 = vmul.f32 %v1174, 0.012345679
    %v1949 = vmul.f32 %v1179, 0.012345679
    %v1950 = vmul.f32 %v1184, 0.012345679
    %v1951 = vmul.f32 %v1189, 0.012345679
    %v1952 = vmul.f32 %v1194, 0.012345679
    %v1953 = vmul.f32 %v1199, 0.012345679
    %v1954 = vmul.f32 %v1204, 0.012345679
    %v1955 = vmul.f32 %v1209, 0.012345679
    %v1956 = vmul.f32 %v1214, 0.012345679
    %v1957 = vmul.f32 %v1219, 0.012345679
    %v1958 = vmul.f32 %v1224, 0.012345679
    %v1959 = vmul.f32 %v1229, 0.012345679
    %v1960 = vmul.f32 %v1234, 0.012345679
    %v1961 = vmul.f32 %v1239, 0.012345679
    %v1962 = vmul.f32 %v1244, 0.012345679
    %v1963 = vmul.f32 %v1249, 0.012345679
    %v1964 = vmul.f32 %v1254, 0.012345679
    %v1965 = vmul.f32 %v1259, 0.012345679
    %v1966 = vmul.f32 %v1264, 0.012345679
    %v1967 = vmul.f32 %v1269, 0.012345679
    %v1968 = vmul.f32 %v1274, 0.012345679
    %v1969 = vmul.f32 %v1279, 0.012345679
    %v1970 = vmul.f32 %v1284, 0.012345679
    %v1971 = vmul.f32 %v1289, 0.012345679
    %v1972 = vmul.f32 %v1294, 0.012345679
    %v1973 = vmul.f32 %v1299, 0.012345679
    %v1974 = vmul.f32 %v1304, 0.012345679
    %v1975 = vmul.f32 %v1309, 0.012345679
    %v1976 = vmul.f32 %v1314, 0.012345679
    %v1977 = vmul.f32 %v1319, 0.012345679
    %v1978 = vmul.f32 %v1324, 0.012345679
    %v1979 = vmul.f32 %v1329, 0.012345679
    %v1980 = vmul.f32 %v1334, 0.012345679
    %v1981 = vmul.f32 %v1339, 0.012345679
    %v1982 = vmul.f32 %v1344, 0.012345679
    %v1983 = vmul.f32 %v1349, 0.012345679
    %v1984 = vmul.f32 %v1354, 0.012345679
    %v1985 = vmul.f32 %v1359, 0.012345679
    %v1986 = vmul.f32 %v1364, 0.012345679
    %v1987 = vmul.f32 %v1369, 0.012345679
    %v1988 = vmul.f32 %v1374, 0.012345679
    %v1989 = vmul.f32 %v1379, 0.012345679
    %v1990 = vmul.f32 %v1384, 0.012345679
    %v1991 = vmul.f32 %v1389, 0.012345679
    %v1992 = vmul.f32 %v1394, 0.012345679
    %v1993 = vmul.f32 %v1399, 0.012345679
    %v1994 = vmul.f32 %v1404, 0.012345679
    %v1995 = vmul.f32 %v1409, 0.012345679
    %v1996 = vmul.f32 %v1414, 0.012345679
    %v1997 = vmul.f32 %v1419, 0.012345679
    %v1998 = vmul.f32 %v1424, 0.012345679
    %v1999 = vmul.f32 %v1429, 0.012345679
    %v2000 = vmul.f32 %v1434, 0.012345679
    %v2001 = vmul.f32 %v1439, 0.012345679
    %v2002 = vmul.f32 %v1444, 0.012345679
    %v2003 = vmul.f32 %v1449, 0.012345679
    %v2004 = vmul.f32 %v1454, 0.012345679
    %v2005 = vmul.f32 %v1459, 0.012345679
    %v2006 = vmul.f32 %v1974, %v1144
    %v2007 = vmul.f32 %v1975, %v1149
    %v2008 = vmul.f32 %v1976, %v1154
    %v2009 = vmul.f32 %v1977, %v1159
    %v2010 = vmul.f32 %v1978, %v1164
    %v2011 = vmul.f32 %v1979, %v1169
    %v2012 = vmul.f32 %v1980, %v1174
    %v2013 = vmul.f32 %v1981, %v1179
    %v2014 = vmul.f32 %v1982, %v1184
    %v2015 = vmul.f32 %v1983, %v1189
    %v2016 = vmul.f32 %v1984, %v1194
    %v2017 = vmul.f32 %v1985, %v1199
    %v2018 = vmul.f32 %v1986, %v1204
    %v2019 = vmul.f32 %v1987, %v1209
    %v2020 = vmul.f32 %v1988, %v1214
    %v2021 = vmul.f32 %v1989, %v1219
    %v2022 = vmul.f32 %v1990, %v1224
    %v2023 = vmul.f32 %v1991, %v1229
    %v2024 = vmul.f32 %v1992, %v1234
    %v2025 = vmul.f32 %v1993, %v1239
    %v2026 = vmul.f32 %v1994, %v1244
    %v2027 = vmul.f32 %v1995, %v1249
    %v2028 = vmul.f32 %v1996, %v1254
    %v2029 = vmul.f32 %v1997, %v1259
    %v2030 = vmul.f32 %v1998, %v1264
    %v2031 = vmul.f32 %v1999, %v1269
    %v2032 = vmul.f32 %v2000, %v1274
    %v2033 = vmul.f32 %v2001, %v1279
    %v2034 = vmul.f32 %v2002, %v1284
    %v2035 = vmul.f32 %v2003, %v1289
    %v2036 = vmul.f32 %v2004, %v1294
    %v2037 = vmul.f32 %v2005, %v1299
    %v2038 = vsub.f32 %v1784, %v2006
    %v2039 = vsub.f32 %v1789, %v2007
    %v2040 = vsub.f32 %v1794, %v2008
    %v2041 = vsub.f32 %v1799, %v2009
    %v2042 = vsub.f32 %v1804, %v2010
    %v2043 = vsub.f32 %v1809, %v2011
    %v2044 = vsub.f32 %v1814, %v2012
    %v2045 = vsub.f32 %v1819, %v2013
    %v2046 = vsub.f32 %v1824, %v2014
    %v2047 = vsub.f32 %v1829, %v2015
    %v2048 = vsub.f32 %v1834, %v2016
    %v2049 = vsub.f32 %v1839, %v2017
    %v2050 = vsub.f32 %v1844, %v2018
    %v2051 = vsub.f32 %v1849, %v2019
    %v2052 = vsub.f32 %v1854, %v2020
    %v2053 = vsub.f32 %v1859, %v2021
    %v2054 = vsub.f32 %v1864, %v2022
    %v2055 = vsub.f32 %v1869, %v2023
    %v2056 = vsub.f32 %v1874, %v2024
    %v2057 = vsub.f32 %v1879, %v2025
    %v2058 = vsub.f32 %v1884, %v2026
    %v2059 = vsub.f32 %v1889, %v2027
    %v2060 = vsub.f32 %v1894, %v2028
    %v2061 = vsub.f32 %v1899, %v2029
    %v2062 = vsub.f32 %v1904, %v2030
    %v2063 = vsub.f32 %v1909, %v2031
    %v2064 = vsub.f32 %v1914, %v2032
    %v2065 = vsub.f32 %v1919, %v2033
    %v2066 = vsub.f32 %v1924, %v2034
    %v2067 = vsub.f32 %v1929, %v2035
    %v2068 = vsub.f32 %v1934, %v2036
    %v2069 = vsub.f32 %v1939, %v2037
    %v2070 = vmul.f32 %v1942, %v1304
    %v2071 = vmul.f32 %v1943, %v1309
    %v2072 = vmul.f32 %v1944, %v1314
    %v2073 = vmul.f32 %v1945, %v1319
    %v2074 = vmul.f32 %v1946, %v1324
    %v2075 = vmul.f32 %v1947, %v1329
    %v2076 = vmul.f32 %v1948, %v1334
    %v2077 = vmul.f32 %v1949, %v1339
    %v2078 = vmul.f32 %v1950, %v1344
    %v2079 = vmul.f32 %v1951, %v1349
    %v2080 = vmul.f32 %v1952, %v1354
    %v2081 = vmul.f32 %v1953, %v1359
    %v2082 = vmul.f32 %v1954, %v1364
    %v2083 = vmul.f32 %v1955, %v1369
    %v2084 = vmul.f32 %v1956, %v1374
    %v2085 = vmul.f32 %v1957, %v1379
    %v2086 = vmul.f32 %v1958, %v1384
    %v2087 = vmul.f32 %v1959, %v1389
    %v2088 = vmul.f32 %v1960, %v1394
    %v2089 = vmul.f32 %v1961, %v1399
    %v2090 = vmul.f32 %v1962, %v1404
    %v2091 = vmul.f32 %v1963, %v1409
    %v2092 = vmul.f32 %v1964, %v1414
    %v2093 = vmul.f32 %v1965, %v1419
    %v2094 = vmul.f32 %v1966, %v1424
    %v2095 = vmul.f32 %v1967, %v1429
    %v2096 = vmul.f32 %v1968, %v1434
    %v2097 = vmul.f32 %v1969, %v1439
    %v2098 = vmul.f32 %v1970, %v1444
    %v2099 = vmul.f32 %v1971, %v1449
    %v2100 = vmul.f32 %v1972, %v1454
    %v2101 = vmul.f32 %v1973, %v1459
    %v2102 = vsub.f32 %v2038, %v2070
    %v2103 = vsub.f32 %v2039, %v2071
    %v2104 = vsub.f32 %v2040, %v2072
    %v2105 = vsub.f32 %v2041, %v2073
    %v2106 = vsub.f32 %v2042, %v2074
    %v2107 = vsub.f32 %v2043, %v2075
    %v2108 = vsub.f32 %v2044, %v2076
    %v2109 = vsub.f32 %v2045, %v2077
    %v2110 = vsub.f32 %v2046, %v2078
    %v2111 = vsub.f32 %v2047, %v2079
    %v2112 = vsub.f32 %v2048, %v2080
    %v2113 = vsub.f32 %v2049, %v2081
    %v2114 = vsub.f32 %v2050, %v2082
    %v2115 = vsub.f32 %v2051, %v2083
    %v2116 = vsub.f32 %v2052, %v2084
    %v2117 = vsub.f32 %v2053, %v2085
    %v2118 = vsub.f32 %v2054, %v2086
    %v2119 = vsub.f32 %v2055, %v2087
    %v2120 = vsub.f32 %v2056, %v2088
    %v2121 = vsub.f32 %v2057, %v2089
    %v2122 = vsub.f32 %v2058, %v2090
    %v2123 = vsub.f32 %v2059, %v2091
    %v2124 = vsub.f32 %v2060, %v2092
    %v2125 = vsub.f32 %v2061, %v2093
    %v2126 = vsub.f32 %v2062, %v2094
    %v2127 = vsub.f32 %v2063, %v2095
    %v2128 = vsub.f32 %v2064, %v2096
    %v2129 = vsub.f32 %v2065, %v2097
    %v2130 = vsub.f32 %v2066, %v2098
    %v2131 = vsub.f32 %v2067, %v2099
    %v2132 = vsub.f32 %v2068, %v2100
    %v2133 = vsub.f32 %v2069, %v2101
    %v2134 = vmul.f32 %v1942, %v1974
    %v2135 = vmul.f32 %v1943, %v1975
    %v2136 = vmul.f32 %v1944, %v1976
    %v2137 = vmul.f32 %v1945, %v1977
    %v2138 = vmul.f32 %v1946, %v1978
    %v2139 = vmul.f32 %v1947, %v1979
    %v2140 = vmul.f32 %v1948, %v1980
    %v2141 = vmul.f32 %v1949, %v1981
    %v2142 = vmul.f32 %v1950, %v1982
    %v2143 = vmul.f32 %v1951, %v1983
    %v2144 = vmul.f32 %v1952, %v1984
    %v2145 = vmul.f32 %v1953, %v1985
    %v2146 = vmul.f32 %v1954, %v1986
    %v2147 = vmul.f32 %v1955, %v1987
    %v2148 = vmul.f32 %v1956, %v1988
    %v2149 = vmul.f32 %v1957, %v1989
    %v2150 = vmul.f32 %v1958, %v1990
    %v2151 = vmul.f32 %v1959, %v1991
    %v2152 = vmul.f32 %v1960, %v1992
    %v2153 = vmul.f32 %v1961, %v1993
    %v2154 = vmul.f32 %v1962, %v1994
    %v2155 = vmul.f32 %v1963, %v1995
    %v2156 = vmul.f32 %v1964, %v1996
    %v2157 = vmul.f32 %v1965, %v1997
    %v2158 = vmul.f32 %v1966, %v1998
    %v2159 = vmul.f32 %v1967, %v1999
    %v2160 = vmul.f32 %v1968, %v2000
    %v2161 = vmul.f32 %v1969, %v2001
    %v2162 = vmul.f32 %v1970, %v2002
    %v2163 = vmul.f32 %v1971, %v2003
    %v2164 = vmul.f32 %v1972, %v2004
    %v2165 = vmul.f32 %v1973, %v2005
    %v2166 = vmul.f32 %v2134, 81.0
    %v2167 = vmul.f32 %v2135, 81.0
    %v2168 = vmul.f32 %v2136, 81.0
    %v2169 = vmul.f32 %v2137, 81.0
    %v2170 = vmul.f32 %v2138, 81.0
    %v2171 = vmul.f32 %v2139, 81.0
    %v2172 = vmul.f32 %v2140, 81.0
    %v2173 = vmul.f32 %v2141, 81.0
    %v2174 = vmul.f32 %v2142, 81.0
    %v2175 = vmul.f32 %v2143, 81.0
    %v2176 = vmul.f32 %v2144, 81.0
    %v2177 = vmul.f32 %v2145, 81.0
    %v2178 = vmul.f32 %v2146, 81.0
    %v2179 = vmul.f32 %v2147, 81.0
    %v2180 = vmul.f32 %v2148, 81.0
    %v2181 = vmul.f32 %v2149, 81.0
    %v2182 = vmul.f32 %v2150, 81.0
    %v2183 = vmul.f32 %v2151, 81.0
    %v2184 = vmul.f32 %v2152, 81.0
    %v2185 = vmul.f32 %v2153, 81.0
    %v2186 = vmul.f32 %v2154, 81.0
    %v2187 = vmul.f32 %v2155, 81.0
    %v2188 = vmul.f32 %v2156, 81.0
    %v2189 = vmul.f32 %v2157, 81.0
    %v2190 = vmul.f32 %v2158, 81.0
    %v2191 = vmul.f32 %v2159, 81.0
    %v2192 = vmul.f32 %v2160, 81.0
    %v2193 = vmul.f32 %v2161, 81.0
    %v2194 = vmul.f32 %v2162, 81.0
    %v2195 = vmul.f32 %v2163, 81.0
    %v2196 = vmul.f32 %v2164, 81.0
    %v2197 = vmul.f32 %v2165, 81.0
    %v2198 = vadd.f32 %v2102, %v2166
    %v2199 = vadd.f32 %v2103, %v2167
    %v2200 = vadd.f32 %v2104, %v2168
    %v2201 = vadd.f32 %v2105, %v2169
    %v2202 = vadd.f32 %v2106, %v2170
    %v2203 = vadd.f32 %v2107, %v2171
    %v2204 = vadd.f32 %v2108, %v2172
    %v2205 = vadd.f32 %v2109, %v2173
    %v2206 = vadd.f32 %v2110, %v2174
    %v2207 = vadd.f32 %v2111, %v2175
    %v2208 = vadd.f32 %v2112, %v2176
    %v2209 = vadd.f32 %v2113, %v2177
    %v2210 = vadd.f32 %v2114, %v2178
    %v2211 = vadd.f32 %v2115, %v2179
    %v2212 = vadd.f32 %v2116, %v2180
    %v2213 = vadd.f32 %v2117, %v2181
    %v2214 = vadd.f32 %v2118, %v2182
    %v2215 = vadd.f32 %v2119, %v2183
    %v2216 = vadd.f32 %v2120, %v2184
    %v2217 = vadd.f32 %v2121, %v2185
    %v2218 = vadd.f32 %v2122, %v2186
    %v2219 = vadd.f32 %v2123, %v2187
    %v2220 = vadd.f32 %v2124, %v2188
    %v2221 = vadd.f32 %v2125, %v2189
    %v2222 = vadd.f32 %v2126, %v2190
    %v2223 = vadd.f32 %v2127, %v2191
    %v2224 = vadd.f32 %v2128, %v2192
    %v2225 = vadd.f32 %v2129, %v2193
    %v2226 = vadd.f32 %v2130, %v2194
    %v2227 = vadd.f32 %v2131, %v2195
    %v2228 = vadd.f32 %v2132, %v2196
    %v2229 = vadd.f32 %v2133, %v2197
    %v2230 = vmul.f32 %v1942, 2.0
    %v2231 = vmul.f32 %v1943, 2.0
    %v2232 = vmul.f32 %v1944, 2.0
    %v2233 = vmul.f32 %v1945, 2.0
    %v2234 = vmul.f32 %v1946, 2.0
    %v2235 = vmul.f32 %v1947, 2.0
    %v2236 = vmul.f32 %v1948, 2.0
    %v2237 = vmul.f32 %v1949, 2.0
    %v2238 = vmul.f32 %v1950, 2.0
    %v2239 = vmul.f32 %v1951, 2.0
    %v2240 = vmul.f32 %v1952, 2.0
    %v2241 = vmul.f32 %v1953, 2.0
    %v2242 = vmul.f32 %v1954, 2.0
    %v2243 = vmul.f32 %v1955, 2.0
    %v2244 = vmul.f32 %v1956, 2.0
    %v2245 = vmul.f32 %v1957, 2.0
    %v2246 = vmul.f32 %v1958, 2.0
    %v2247 = vmul.f32 %v1959, 2.0
    %v2248 = vmul.f32 %v1960, 2.0
    %v2249 = vmul.f32 %v1961, 2.0
    %v2250 = vmul.f32 %v1962, 2.0
    %v2251 = vmul.f32 %v1963, 2.0
    %v2252 = vmul.f32 %v1964, 2.0
    %v2253 = vmul.f32 %v1965, 2.0
    %v2254 = vmul.f32 %v1966, 2.0
    %v2255 = vmul.f32 %v1967, 2.0
    %v2256 = vmul.f32 %v1968, 2.0
    %v2257 = vmul.f32 %v1969, 2.0
    %v2258 = vmul.f32 %v1970, 2.0
    %v2259 = vmul.f32 %v1971, 2.0
    %v2260 = vmul.f32 %v1972, 2.0
    %v2261 = vmul.f32 %v1973, 2.0
    %v2262 = vmul.f32 %v2230, %v1144
    %v2263 = vmul.f32 %v2231, %v1149
    %v2264 = vmul.f32 %v2232, %v1154
    %v2265 = vmul.f32 %v2233, %v1159
    %v2266 = vmul.f32 %v2234, %v1164
    %v2267 = vmul.f32 %v2235, %v1169
    %v2268 = vmul.f32 %v2236, %v1174
    %v2269 = vmul.f32 %v2237, %v1179
    %v2270 = vmul.f32 %v2238, %v1184
    %v2271 = vmul.f32 %v2239, %v1189
    %v2272 = vmul.f32 %v2240, %v1194
    %v2273 = vmul.f32 %v2241, %v1199
    %v2274 = vmul.f32 %v2242, %v1204
    %v2275 = vmul.f32 %v2243, %v1209
    %v2276 = vmul.f32 %v2244, %v1214
    %v2277 = vmul.f32 %v2245, %v1219
    %v2278 = vmul.f32 %v2246, %v1224
    %v2279 = vmul.f32 %v2247, %v1229
    %v2280 = vmul.f32 %v2248, %v1234
    %v2281 = vmul.f32 %v2249, %v1239
    %v2282 = vmul.f32 %v2250, %v1244
    %v2283 = vmul.f32 %v2251, %v1249
    %v2284 = vmul.f32 %v2252, %v1254
    %v2285 = vmul.f32 %v2253, %v1259
    %v2286 = vmul.f32 %v2254, %v1264
    %v2287 = vmul.f32 %v2255, %v1269
    %v2288 = vmul.f32 %v2256, %v1274
    %v2289 = vmul.f32 %v2257, %v1279
    %v2290 = vmul.f32 %v2258, %v1284
    %v2291 = vmul.f32 %v2259, %v1289
    %v2292 = vmul.f32 %v2260, %v1294
    %v2293 = vmul.f32 %v2261, %v1299
    %v2294 = vsub.f32 %v1464, %v2262
    %v2295 = vsub.f32 %v1469, %v2263
    %v2296 = vsub.f32 %v1474, %v2264
    %v2297 = vsub.f32 %v1479, %v2265
    %v2298 = vsub.f32 %v1484, %v2266
    %v2299 = vsub.f32 %v1489, %v2267
    %v2300 = vsub.f32 %v1494, %v2268
    %v2301 = vsub.f32 %v1499, %v2269
    %v2302 = vsub.f32 %v1504, %v2270
    %v2303 = vsub.f32 %v1509, %v2271
    %v2304 = vsub.f32 %v1514, %v2272
    %v2305 = vsub.f32 %v1519, %v2273
    %v2306 = vsub.f32 %v1524, %v2274
    %v2307 = vsub.f32 %v1529, %v2275
    %v2308 = vsub.f32 %v1534, %v2276
    %v2309 = vsub.f32 %v1539, %v2277
    %v2310 = vsub.f32 %v1544, %v2278
    %v2311 = vsub.f32 %v1549, %v2279
    %v2312 = vsub.f32 %v1554, %v2280
    %v2313 = vsub.f32 %v1559, %v2281
    %v2314 = vsub.f32 %v1564, %v2282
    %v2315 = vsub.f32 %v1569, %v2283
    %v2316 = vsub.f32 %v1574, %v2284
    %v2317 = vsub.f32 %v1579, %v2285
    %v2318 = vsub.f32 %v1584, %v2286
    %v2319 = vsub.f32 %v1589, %v2287
    %v2320 = vsub.f32 %v1594, %v2288
    %v2321 = vsub.f32 %v1599, %v2289
    %v2322 = vsub.f32 %v1604, %v2290
    %v2323 = vsub.f32 %v1609, %v2291
    %v2324 = vsub.f32 %v1614, %v2292
    %v2325 = vsub.f32 %v1619, %v2293
    %v2326 = vmul.f32 %v1942, %v1942
    %v2327 = vmul.f32 %v1943, %v1943
    %v2328 = vmul.f32 %v1944, %v1944
    %v2329 = vmul.f32 %v1945, %v1945
    %v2330 = vmul.f32 %v1946, %v1946
    %v2331 = vmul.f32 %v1947, %v1947
    %v2332 = vmul.f32 %v1948, %v1948
    %v2333 = vmul.f32 %v1949, %v1949
    %v2334 = vmul.f32 %v1950, %v1950
    %v2335 = vmul.f32 %v1951, %v1951
    %v2336 = vmul.f32 %v1952, %v1952
    %v2337 = vmul.f32 %v1953, %v1953
    %v2338 = vmul.f32 %v1954, %v1954
    %v2339 = vmul.f32 %v1955, %v1955
    %v2340 = vmul.f32 %v1956, %v1956
    %v2341 = vmul.f32 %v1957, %v1957
    %v2342 = vmul.f32 %v1958, %v1958
    %v2343 = vmul.f32 %v1959, %v1959
    %v2344 = vmul.f32 %v1960, %v1960
    %v2345 = vmul.f32 %v1961, %v1961
    %v2346 = vmul.f32 %v1962, %v1962
    %v2347 = vmul.f32 %v1963, %v1963
    %v2348 = vmul.f32 %v1964, %v1964
    %v2349 = vmul.f32 %v1965, %v1965
    %v2350 = vmul.f32 %v1966, %v1966
    %v2351 = vmul.f32 %v1967, %v1967
    %v2352 = vmul.f32 %v1968, %v1968
    %v2353 = vmul.f32 %v1969, %v1969
    %v2354 = vmul.f32 %v1970, %v1970
    %v2355 = vmul.f32 %v1971, %v1971
    %v2356 = vmul.f32 %v1972, %v1972
    %v2357 = vmul.f32 %v1973, %v1973
    %v2358 = vmul.f32 %v2326, 81.0
    %v2359 = vmul.f32 %v2327, 81.0
    %v2360 = vmul.f32 %v2328, 81.0
    %v2361 = vmul.f32 %v2329, 81.0
    %v2362 = vmul.f32 %v2330, 81.0
    %v2363 = vmul.f32 %v2331, 81.0
    %v2364 = vmul.f32 %v2332, 81.0
    %v2365 = vmul.f32 %v2333, 81.0
    %v2366 = vmul.f32 %v2334, 81.0
    %v2367 = vmul.f32 %v2335, 81.0
    %v2368 = vmul.f32 %v2336, 81.0
    %v2369 = vmul.f32 %v2337, 81.0
    %v2370 = vmul.f32 %v2338, 81.0
    %v2371 = vmul.f32 %v2339, 81.0
    %v2372 = vmul.f32 %v2340, 81.0
    %v2373 = vmul.f32 %v2341, 81.0
    %v2374 = vmul.f32 %v2342, 81.0
    %v2375 = vmul.f32 %v2343, 81.0
    %v2376 = vmul.f32 %v2344, 81.0
    %v2377 = vmul.f32 %v2345, 81.0
    %v2378 = vmul.f32 %v2346, 81.0
    %v2379 = vmul.f32 %v2347, 81.0
    %v2380 = vmul.f32 %v2348, 81.0
    %v2381 = vmul.f32 %v2349, 81.0
    %v2382 = vmul.f32 %v2350, 81.0
    %v2383 = vmul.f32 %v2351, 81.0
    %v2384 = vmul.f32 %v2352, 81.0
    %v2385 = vmul.f32 %v2353, 81.0
    %v2386 = vmul.f32 %v2354, 81.0
    %v2387 = vmul.f32 %v2355, 81.0
    %v2388 = vmul.f32 %v2356, 81.0
    %v2389 = vmul.f32 %v2357, 81.0
    %v2390 = vadd.f32 %v2294, %v2358
    %v2391 = vadd.f32 %v2295, %v2359
    %v2392 = vadd.f32 %v2296, %v2360
    %v2393 = vadd.f32 %v2297, %v2361
    %v2394 = vadd.f32 %v2298, %v2362
    %v2395 = vadd.f32 %v2299, %v2363
    %v2396 = vadd.f32 %v2300, %v2364
    %v2397 = vadd.f32 %v2301, %v2365
    %v2398 = vadd.f32 %v2302, %v2366
    %v2399 = vadd.f32 %v2303, %v2367
    %v2400 = vadd.f32 %v2304, %v2368
    %v2401 = vadd.f32 %v2305, %v2369
    %v2402 = vadd.f32 %v2306, %v2370
    %v2403 = vadd.f32 %v2307, %v2371
    %v2404 = vadd.f32 %v2308, %v2372
    %v2405 = vadd.f32 %v2309, %v2373
    %v2406 = vadd.f32 %v2310, %v2374
    %v2407 = vadd.f32 %v2311, %v2375
    %v2408 = vadd.f32 %v2312, %v2376
    %v2409 = vadd.f32 %v2313, %v2377
    %v2410 = vadd.f32 %v2314, %v2378
    %v2411 = vadd.f32 %v2315, %v2379
    %v2412 = vadd.f32 %v2316, %v2380
    %v2413 = vadd.f32 %v2317, %v2381
    %v2414 = vadd.f32 %v2318, %v2382
    %v2415 = vadd.f32 %v2319, %v2383
    %v2416 = vadd.f32 %v2320, %v2384
    %v2417 = vadd.f32 %v2321, %v2385
    %v2418 = vadd.f32 %v2322, %v2386
    %v2419 = vadd.f32 %v2323, %v2387
    %v2420 = vadd.f32 %v2324, %v2388
    %v2421 = vadd.f32 %v2325, %v2389
    %v2422 = vmul.f32 %v1974, 2.0
    %v2423 = vmul.f32 %v1975, 2.0
    %v2424 = vmul.f32 %v1976, 2.0
    %v2425 = vmul.f32 %v1977, 2.0
    %v2426 = vmul.f32 %v1978, 2.0
    %v2427 = vmul.f32 %v1979, 2.0
    %v2428 = vmul.f32 %v1980, 2.0
    %v2429 = vmul.f32 %v1981, 2.0
    %v2430 = vmul.f32 %v1982, 2.0
    %v2431 = vmul.f32 %v1983, 2.0
    %v2432 = vmul.f32 %v1984, 2.0
    %v2433 = vmul.f32 %v1985, 2.0
    %v2434 = vmul.f32 %v1986, 2.0
    %v2435 = vmul.f32 %v1987, 2.0
    %v2436 = vmul.f32 %v1988, 2.0
    %v2437 = vmul.f32 %v1989, 2.0
    %v2438 = vmul.f32 %v1990, 2.0
    %v2439 = vmul.f32 %v1991, 2.0
    %v2440 = vmul.f32 %v1992, 2.0
    %v2441 = vmul.f32 %v1993, 2.0
    %v2442 = vmul.f32 %v1994, 2.0
    %v2443 = vmul.f32 %v1995, 2.0
    %v2444 = vmul.f32 %v1996, 2.0
    %v2445 = vmul.f32 %v1997, 2.0
    %v2446 = vmul.f32 %v1998, 2.0
    %v2447 = vmul.f32 %v1999, 2.0
    %v2448 = vmul.f32 %v2000, 2.0
    %v2449 = vmul.f32 %v2001, 2.0
    %v2450 = vmul.f32 %v2002, 2.0
    %v2451 = vmul.f32 %v2003, 2.0
    %v2452 = vmul.f32 %v2004, 2.0
    %v2453 = vmul.f32 %v2005, 2.0
    %v2454 = vmul.f32 %v2422, %v1304
    %v2455 = vmul.f32 %v2423, %v1309
    %v2456 = vmul.f32 %v2424, %v1314
    %v2457 = vmul.f32 %v2425, %v1319
    %v2458 = vmul.f32 %v2426, %v1324
    %v2459 = vmul.f32 %v2427, %v1329
    %v2460 = vmul.f32 %v2428, %v1334
    %v2461 = vmul.f32 %v2429, %v1339
    %v2462 = vmul.f32 %v2430, %v1344
    %v2463 = vmul.f32 %v2431, %v1349
    %v2464 = vmul.f32 %v2432, %v1354
    %v2465 = vmul.f32 %v2433, %v1359
    %v2466 = vmul.f32 %v2434, %v1364
    %v2467 = vmul.f32 %v2435, %v1369
    %v2468 = vmul.f32 %v2436, %v1374
    %v2469 = vmul.f32 %v2437, %v1379
    %v2470 = vmul.f32 %v2438, %v1384
    %v2471 = vmul.f32 %v2439, %v1389
    %v2472 = vmul.f32 %v2440, %v1394
    %v2473 = vmul.f32 %v2441, %v1399
    %v2474 = vmul.f32 %v2442, %v1404
    %v2475 = vmul.f32 %v2443, %v1409
    %v2476 = vmul.f32 %v2444, %v1414
    %v2477 = vmul.f32 %v2445, %v1419
    %v2478 = vmul.f32 %v2446, %v1424
    %v2479 = vmul.f32 %v2447, %v1429
    %v2480 = vmul.f32 %v2448, %v1434
    %v2481 = vmul.f32 %v2449, %v1439
    %v2482 = vmul.f32 %v2450, %v1444
    %v2483 = vmul.f32 %v2451, %v1449
    %v2484 = vmul.f32 %v2452, %v1454
    %v2485 = vmul.f32 %v2453, %v1459
    %v2486 = vsub.f32 %v1624, %v2454
    %v2487 = vsub.f32 %v1629, %v2455
    %v2488 = vsub.f32 %v1634, %v2456
    %v2489 = vsub.f32 %v1639, %v2457
    %v2490 = vsub.f32 %v1644, %v2458
    %v2491 = vsub.f32 %v1649, %v2459
    %v2492 = vsub.f32 %v1654, %v2460
    %v2493 = vsub.f32 %v1659, %v2461
    %v2494 = vsub.f32 %v1664, %v2462
    %v2495 = vsub.f32 %v1669, %v2463
    %v2496 = vsub.f32 %v1674, %v2464
    %v2497 = vsub.f32 %v1679, %v2465
    %v2498 = vsub.f32 %v1684, %v2466
    %v2499 = vsub.f32 %v1689, %v2467
    %v2500 = vsub.f32 %v1694, %v2468
    %v2501 = vsub.f32 %v1699, %v2469
    %v2502 = vsub.f32 %v1704, %v2470
    %v2503 = vsub.f32 %v1709, %v2471
    %v2504 = vsub.f32 %v1714, %v2472
    %v2505 = vsub.f32 %v1719, %v2473
    %v2506 = vsub.f32 %v1724, %v2474
    %v2507 = vsub.f32 %v1729, %v2475
    %v2508 = vsub.f32 %v1734, %v2476
    %v2509 = vsub.f32 %v1739, %v2477
    %v2510 = vsub.f32 %v1744, %v2478
    %v2511 = vsub.f32 %v1749, %v2479
    %v2512 = vsub.f32 %v1754, %v2480
    %v2513 = vsub.f32 %v1759, %v2481
    %v2514 = vsub.f32 %v1764, %v2482
    %v2515 = vsub.f32 %v1769, %v2483
    %v2516 = vsub.f32 %v1774, %v2484
    %v2517 = vsub.f32 %v1779, %v2485
    %v2518 = vmul.f32 %v1974, %v1974
    %v2519 = vmul.f32 %v1975, %v1975
    %v2520 = vmul.f32 %v1976, %v1976
    %v2521 = vmul.f32 %v1977, %v1977
    %v2522 = vmul.f32 %v1978, %v1978
    %v2523 = vmul.f32 %v1979, %v1979
    %v2524 = vmul.f32 %v1980, %v1980
    %v2525 = vmul.f32 %v1981, %v1981
    %v2526 = vmul.f32 %v1982, %v1982
    %v2527 = vmul.f32 %v1983, %v1983
    %v2528 = vmul.f32 %v1984, %v1984
    %v2529 = vmul.f32 %v1985, %v1985
    %v2530 = vmul.f32 %v1986, %v1986
    %v2531 = vmul.f32 %v1987, %v1987
    %v2532 = vmul.f32 %v1988, %v1988
    %v2533 = vmul.f32 %v1989, %v1989
    %v2534 = vmul.f32 %v1990, %v1990
    %v2535 = vmul.f32 %v1991, %v1991
    %v2536 = vmul.f32 %v1992, %v1992
    %v2537 = vmul.f32 %v1993, %v1993
    %v2538 = vmul.f32 %v1994, %v1994
    %v2539 = vmul.f32 %v1995, %v1995
    %v2540 = vmul.f32 %v1996, %v1996
    %v2541 = vmul.f32 %v1997, %v1997
    %v2542 = vmul.f32 %v1998, %v1998
    %v2543 = vmul.f32 %v1999, %v1999
    %v2544 = vmul.f32 %v2000, %v2000
    %v2545 = vmul.f32 %v2001, %v2001
    %v2546 = vmul.f32 %v2002, %v2002
    %v2547 = vmul.f32 %v2003, %v2003
    %v2548 = vmul.f32 %v2004, %v2004
    %v2549 = vmul.f32 %v2005, %v2005
    %v2550 = vmul.f32 %v2518, 81.0
    %v2551 = vmul.f32 %v2519, 81.0
    %v2552 = vmul.f32 %v2520, 81.0
    %v2553 = vmul.f32 %v2521, 81.0
    %v2554 = vmul.f32 %v2522, 81.0
    %v2555 = vmul.f32 %v2523, 81.0
    %v2556 = vmul.f32 %v2524, 81.0
    %v2557 = vmul.f32 %v2525, 81.0
    %v2558 = vmul.f32 %v2526, 81.0
    %v2559 = vmul.f32 %v2527, 81.0
    %v2560 = vmul.f32 %v2528, 81.0
    %v2561 = vmul.f32 %v2529, 81.0
    %v2562 = vmul.f32 %v2530, 81.0
    %v2563 = vmul.f32 %v2531, 81.0
    %v2564 = vmul.f32 %v2532, 81.0
    %v2565 = vmul.f32 %v2533, 81.0
    %v2566 = vmul.f32 %v2534, 81.0
    %v2567 = vmul.f32 %v2535, 81.0
    %v2568 = vmul.f32 %v2536, 81.0
    %v2569 = vmul.f32 %v2537, 81.0
    %v2570 = vmul.f32 %v2538, 81.0
    %v2571 = vmul.f32 %v2539, 81.0
    %v2572 = vmul.f32 %v2540, 81.0
    %v2573 = vmul.f32 %v2541, 81.0
    %v2574 = vmul.f32 %v2542, 81.0
    %v2575 = vmul.f32 %v2543, 81.0
    %v2576 = vmul.f32 %v2544, 81.0
    %v2577 = vmul.f32 %v2545, 81.0
    %v2578 = vmul.f32 %v2546, 81.0
    %v2579 = vmul.f32 %v2547, 81.0
    %v2580 = vmul.f32 %v2548, 81.0
    %v2581 = vmul.f32 %v2549, 81.0
    %v2582 = vadd.f32 %v2486, %v2550
    %v2583 = vadd.f32 %v2487, %v2551
    %v2584 = vadd.f32 %v2488, %v2552
    %v2585 = vadd.f32 %v2489, %v2553
    %v2586 = vadd.f32 %v2490, %v2554
    %v2587 = vadd.f32 %v2491, %v2555
    %v2588 = vadd.f32 %v2492, %v2556
    %v2589 = vadd.f32 %v2493, %v2557
    %v2590 = vadd.f32 %v2494, %v2558
    %v2591 = vadd.f32 %v2495, %v2559
    %v2592 = vadd.f32 %v2496, %v2560
    %v2593 = vadd.f32 %v2497, %v2561
    %v2594 = vadd.f32 %v2498, %v2562
    %v2595 = vadd.f32 %v2499, %v2563
    %v2596 = vadd.f32 %v2500, %v2564
    %v2597 = vadd.f32 %v2501, %v2565
    %v2598 = vadd.f32 %v2502, %v2566
    %v2599 = vadd.f32 %v2503, %v2567
    %v2600 = vadd.f32 %v2504, %v2568
    %v2601 = vadd.f32 %v2505, %v2569
    %v2602 = vadd.f32 %v2506, %v2570
    %v2603 = vadd.f32 %v2507, %v2571
    %v2604 = vadd.f32 %v2508, %v2572
    %v2605 = vadd.f32 %v2509, %v2573
    %v2606 = vadd.f32 %v2510, %v2574
    %v2607 = vadd.f32 %v2511, %v2575
    %v2608 = vadd.f32 %v2512, %v2576
    %v2609 = vadd.f32 %v2513, %v2577
    %v2610 = vadd.f32 %v2514, %v2578
    %v2611 = vadd.f32 %v2515, %v2579
    %v2612 = vadd.f32 %v2516, %v2580
    %v2613 = vadd.f32 %v2517, %v2581
    %v2614 = vmul.f32 %v2198, %v2198
    %v2615 = vmul.f32 %v2199, %v2199
    %v2616 = vmul.f32 %v2200, %v2200
    %v2617 = vmul.f32 %v2201, %v2201
    %v2618 = vmul.f32 %v2202, %v2202
    %v2619 = vmul.f32 %v2203, %v2203
    %v2620 = vmul.f32 %v2204, %v2204
    %v2621 = vmul.f32 %v2205, %v2205
    %v2622 = vmul.f32 %v2206, %v2206
    %v2623 = vmul.f32 %v2207, %v2207
    %v2624 = vmul.f32 %v2208, %v2208
    %v2625 = vmul.f32 %v2209, %v2209
    %v2626 = vmul.f32 %v2210, %v2210
    %v2627 = vmul.f32 %v2211, %v2211
    %v2628 = vmul.f32 %v2212, %v2212
    %v2629 = vmul.f32 %v2213, %v2213
    %v2630 = vmul.f32 %v2214, %v2214
    %v2631 = vmul.f32 %v2215, %v2215
    %v2632 = vmul.f32 %v2216, %v2216
    %v2633 = vmul.f32 %v2217, %v2217
    %v2634 = vmul.f32 %v2218, %v2218
    %v2635 = vmul.f32 %v2219, %v2219
    %v2636 = vmul.f32 %v2220, %v2220
    %v2637 = vmul.f32 %v2221, %v2221
    %v2638 = vmul.f32 %v2222, %v2222
    %v2639 = vmul.f32 %v2223, %v2223
    %v2640 = vmul.f32 %v2224, %v2224
    %v2641 = vmul.f32 %v2225, %v2225
    %v2642 = vmul.f32 %v2226, %v2226
    %v2643 = vmul.f32 %v2227, %v2227
    %v2644 = vmul.f32 %v2228, %v2228
    %v2645 = vmul.f32 %v2229, %v2229
    %v2646 = vmul.f32 %v2390, %v2582
    %v2647 = vmul.f32 %v2391, %v2583
    %v2648 = vmul.f32 %v2392, %v2584
    %v2649 = vmul.f32 %v2393, %v2585
    %v2650 = vmul.f32 %v2394, %v2586
    %v2651 = vmul.f32 %v2395, %v2587
    %v2652 = vmul.f32 %v2396, %v2588
    %v2653 = vmul.f32 %v2397, %v2589
    %v2654 = vmul.f32 %v2398, %v2590
    %v2655 = vmul.f32 %v2399, %v2591
    %v2656 = vmul.f32 %v2400, %v2592
    %v2657 = vmul.f32 %v2401, %v2593
    %v2658 = vmul.f32 %v2402, %v2594
    %v2659 = vmul.f32 %v2403, %v2595
    %v2660 = vmul.f32 %v2404, %v2596
    %v2661 = vmul.f32 %v2405, %v2597
    %v2662 = vmul.f32 %v2406, %v2598
    %v2663 = vmul.f32 %v2407, %v2599
    %v2664 = vmul.f32 %v2408, %v2600
    %v2665 = vmul.f32 %v2409, %v2601
    %v2666 = vmul.f32 %v2410, %v2602
    %v2667 = vmul.f32 %v2411, %v2603
    %v2668 = vmul.f32 %v2412, %v2604
    %v2669 = vmul.f32 %v2413, %v2605
    %v2670 = vmul.f32 %v2414, %v2606
    %v2671 = vmul.f32 %v2415, %v2607
    %v2672 = vmul.f32 %v2416, %v2608
    %v2673 = vmul.f32 %v2417, %v2609
    %v2674 = vmul.f32 %v2418, %v2610
    %v2675 = vmul.f32 %v2419, %v2611
    %v2676 = vmul.f32 %v2420, %v2612
    %v2677 = vmul.f32 %v2421, %v2613
    %v2678 = vadd.f32 %v2646, 1e-05
    %v2679 = vadd.f32 %v2647, 1e-05
    %v2680 = vadd.f32 %v2648, 1e-05
    %v2681 = vadd.f32 %v2649, 1e-05
    %v2682 = vadd.f32 %v2650, 1e-05
    %v2683 = vadd.f32 %v2651, 1e-05
    %v2684 = vadd.f32 %v2652, 1e-05
    %v2685 = vadd.f32 %v2653, 1e-05
    %v2686 = vadd.f32 %v2654, 1e-05
    %v2687 = vadd.f32 %v2655, 1e-05
    %v2688 = vadd.f32 %v2656, 1e-05
    %v2689 = vadd.f32 %v2657, 1e-05
    %v2690 = vadd.f32 %v2658, 1e-05
    %v2691 = vadd.f32 %v2659, 1e-05
    %v2692 = vadd.f32 %v2660, 1e-05
    %v2693 = vadd.f32 %v2661, 1e-05
    %v2694 = vadd.f32 %v2662, 1e-05
    %v2695 = vadd.f32 %v2663, 1e-05
    %v2696 = vadd.f32 %v2664, 1e-05
    %v2697 = vadd.f32 %v2665, 1e-05
    %v2698 = vadd.f32 %v2666, 1e-05
    %v2699 = vadd.f32 %v2667, 1e-05
    %v2700 = vadd.f32 %v2668, 1e-05
    %v2701 = vadd.f32 %v2669, 1e-05
    %v2702 = vadd.f32 %v2670, 1e-05
    %v2703 = vadd.f32 %v2671, 1e-05
    %v2704 = vadd.f32 %v2672, 1e-05
    %v2705 = vadd.f32 %v2673, 1e-05
    %v2706 = vadd.f32 %v2674, 1e-05
    %v2707 = vadd.f32 %v2675, 1e-05
    %v2708 = vadd.f32 %v2676, 1e-05
    %v2709 = vadd.f32 %v2677, 1e-05
    %v2710 = vrcp.pop %v2678
    %v2711 = vrcp.pop %v2679
    %v2712 = vrcp.pop %v2680
    %v2713 = vrcp.pop %v2681
    %v2714 = vrcp.pop %v2682
    %v2715 = vrcp.pop %v2683
    %v2716 = vrcp.pop %v2684
    %v2717 = vrcp.pop %v2685
    %v2718 = vrcp.pop %v2686
    %v2719 = vrcp.pop %v2687
    %v2720 = vrcp.pop %v2688
    %v2721 = vrcp.pop %v2689
    %v2722 = vrcp.pop %v2690
    %v2723 = vrcp.pop %v2691
    %v2724 = vrcp.pop %v2692
    %v2725 = vrcp.pop %v2693
    %v2726 = vrcp.pop %v2694
    %v2727 = vrcp.pop %v2695
    %v2728 = vrcp.pop %v2696
    %v2729 = vrcp.pop %v2697
    %v2730 = vrcp.pop %v2698
    %v2731 = vrcp.pop %v2699
    %v2732 = vrcp.pop %v2700
    %v2733 = vrcp.pop %v2701
    %v2734 = vrcp.pop %v2702
    %v2735 = vrcp.pop %v2703
    %v2736 = vrcp.pop %v2704
    %v2737 = vrcp.pop %v2705
    %v2738 = vrcp.pop %v2706
    %v2739 = vrcp.pop %v2707
    %v2740 = vrcp.pop %v2708
    %v2741 = vrcp.pop %v2709
    %v2742 = vmul.f32 %v2614, %v2710
    %v2743 = vmul.f32 %v2615, %v2711
    %v2744 = vmul.f32 %v2616, %v2712
    %v2745 = vmul.f32 %v2617, %v2713
    %v2746 = vmul.f32 %v2618, %v2714
    %v2747 = vmul.f32 %v2619, %v2715
    %v2748 = vmul.f32 %v2620, %v2716
    %v2749 = vmul.f32 %v2621, %v2717
    %v2750 = vmul.f32 %v2622, %v2718
    %v2751 = vmul.f32 %v2623, %v2719
    %v2752 = vmul.f32 %v2624, %v2720
    %v2753 = vmul.f32 %v2625, %v2721
    %v2754 = vmul.f32 %v2626, %v2722
    %v2755 = vmul.f32 %v2627, %v2723
    %v2756 = vmul.f32 %v2628, %v2724
    %v2757 = vmul.f32 %v2629, %v2725
    %v2758 = vmul.f32 %v2630, %v2726
    %v2759 = vmul.f32 %v2631, %v2727
    %v2760 = vmul.f32 %v2632, %v2728
    %v2761 = vmul.f32 %v2633, %v2729
    %v2762 = vmul.f32 %v2634, %v2730
    %v2763 = vmul.f32 %v2635, %v2731
    %v2764 = vmul.f32 %v2636, %v2732
    %v2765 = vmul.f32 %v2637, %v2733
    %v2766 = vmul.f32 %v2638, %v2734
    %v2767 = vmul.f32 %v2639, %v2735
    %v2768 = vmul.f32 %v2640, %v2736
    %v2769 = vmul.f32 %v2641, %v2737
    %v2770 = vmul.f32 %v2642, %v2738
    %v2771 = vmul.f32 %v2643, %v2739
    %v2772 = vmul.f32 %v2644, %v2740
    %v2773 = vmul.f32 %v2645, %v2741
    %v2774 = vsel %vm596, %v2742, 0.0
    %v2775 = vsel %vm596, %v2743, 0.0
    %v2776 = vadd.f32 %v2774, %v2775
    %v2777 = vsel %vm596, %v2744, 0.0
    %v2778 = vadd.f32 %v2776, %v2777
    %v2779 = vsel %vm596, %v2745, 0.0
    %v2780 = vadd.f32 %v2778, %v2779
    %v2781 = vsel %vm596, %v2746, 0.0
    %v2782 = vadd.f32 %v2780, %v2781
    %v2783 = vsel %vm596, %v2747, 0.0
    %v2784 = vadd.f32 %v2782, %v2783
    %v2785 = vsel %vm596, %v2748, 0.0
    %v2786 = vadd.f32 %v2784, %v2785
    %v2787 = vsel %vm596, %v2749, 0.0
    %v2788 = vadd.f32 %v2786, %v2787
    %v2789 = vsel %vm596, %v2750, 0.0
    %v2790 = vadd.f32 %v2788, %v2789
    %v2791 = vsel %vm596, %v2751, 0.0
    %v2792 = vadd.f32 %v2790, %v2791
    %v2793 = vsel %vm596, %v2752, 0.0
    %v2794 = vadd.f32 %v2792, %v2793
    %v2795 = vsel %vm596, %v2753, 0.0
    %v2796 = vadd.f32 %v2794, %v2795
    %v2797 = vsel %vm596, %v2754, 0.0
    %v2798 = vadd.f32 %v2796, %v2797
    %v2799 = vsel %vm596, %v2755, 0.0
    %v2800 = vadd.f32 %v2798, %v2799
    %v2801 = vsel %vm596, %v2756, 0.0
    %v2802 = vadd.f32 %v2800, %v2801
    %v2803 = vsel %vm596, %v2757, 0.0
    %v2804 = vadd.f32 %v2802, %v2803
    %v2805 = vsel %vm596, %v2758, 0.0
    %v2806 = vadd.f32 %v2804, %v2805
    %v2807 = vsel %vm596, %v2759, 0.0
    %v2808 = vadd.f32 %v2806, %v2807
    %v2809 = vsel %vm596, %v2760, 0.0
    %v2810 = vadd.f32 %v2808, %v2809
    %v2811 = vsel %vm596, %v2761, 0.0
    %v2812 = vadd.f32 %v2810, %v2811
    %v2813 = vsel %vm596, %v2762, 0.0
    %v2814 = vadd.f32 %v2812, %v2813
    %v2815 = vsel %vm596, %v2763, 0.0
    %v2816 = vadd.f32 %v2814, %v2815
    %v2817 = vsel %vm596, %v2764, 0.0
    %v2818 = vadd.f32 %v2816, %v2817
    %v2819 = vsel %vm596, %v2765, 0.0
    %v2820 = vadd.f32 %v2818, %v2819
    %v2821 = vsel %vm596, %v2766, 0.0
    %v2822 = vadd.f32 %v2820, %v2821
    %v2823 = vsel %vm596, %v2767, 0.0
    %v2824 = vadd.f32 %v2822, %v2823
    %v2825 = vsel %vm596, %v2768, 0.0
    %v2826 = vadd.f32 %v2824, %v2825
    %v2827 = vsel %vm596, %v2769, 0.0
    %v2828 = vadd.f32 %v2826, %v2827
    %v2829 = vsel %vm596, %v2770, 0.0
    %v2830 = vadd.f32 %v2828, %v2829
    %v2831 = vsel %vm596, %v2771, 0.0
    %v2832 = vadd.f32 %v2830, %v2831
    %v2833 = vsel %vm596, %v2772, 0.0
    %v2834 = vadd.f32 %v2832, %v2833
    %v2835 = vsel %vm596, %v2773, 0.0
    %v2836 = vadd.f32 %v2834, %v2835
    %v2837 = vrot.slane %v2836, 4
    %v2838 = vadd.f32 %v2836, %v2837
    %v2839 = vrot.slane %v2838, 2
    %v2840 = vadd.f32 %v2838, %v2839
    %v2841 = vrot.slane %v2840, 1
    %v2842 = vadd.f32 %v2840, %v2841
    %vm2843 = vcmask 122880
    %2844 = vst.msk [vmem:[#allocation10] sm:$0x1] %vm2843, %v2842
    // Predicated region
    $region34: #{ncc_vxm_loss.1} parent=1 // pred_check
      _
    $region35: #{ncc_vxm_loss.1} parent=1 // pred_check_branch
      %2846 = sbr.rel (0) target = $region37
    $region36: #{ncc_vxm_loss.1} parent=1 // pred_region
      %s2848 = ssub.s32 16, 16
      %2849 = vsyncadd [#allocation4], %s2848
      %s2851 = sshll.u32 [#allocation10], 4
      %s2852 = int_to_ptr.vmem [resolvable:$true] %s2851
      %2854 = dma.vmem_to_hbm [thread:$0]  %s2852, 16, %s4, [#allocation4]
    $region37: #{ncc_vxm_loss.1} parent=1 // pred_fallthru
      _
    // Predicated region
    $region38: #{ncc_vxm_loss.1} parent=1 // pred_check
      _
    $region39: #{ncc_vxm_loss.1} parent=1 // pred_check_branch
      %2856 = sbr.rel (0) target = $region41
    $region40: #{ncc_vxm_loss.1} parent=1 // pred_region
      %2857 = dma.done [#allocation4], 16
    $region41: #{ncc_vxm_loss.1} parent=1 // pred_fallthru
      _
    %2858 = vsyncpa [#allocation3], 1
    %2859 = vsyncpa [#allocation6], 1
    %2860 = vsyncpa [#allocation9], 1
    %2861 = vsyncpa [#allocation4], 1

</llo_original>
